<compile_context>
chip_gen: v5e
topology: v5e:2x2
jax: 0.10.0
libtpu: 0.0.40
codegen_flags: <defaults>
</compile_context>

<pallas_src>
import math
import numpy as np
import jax
import jax.numpy as jnp
from jax.experimental import pallas as pl
from jax.experimental.pallas import tpu as pltpu

_LANE = 128


def _round_up(x, m):
    return ((x + m - 1) // m) * m


def _vmem_budget_and_limit():
    """Per-generation VMEM budget: big tiles on 128-MiB parts, conservative on v7x."""
    cap = None
    try:
        cap = int(pltpu.get_tpu_info().vmem_capacity_bytes)
    except Exception:
        cap = None
    if cap is not None and cap >= 100 * 1024 * 1024:      # v5e / v6e: 128 MiB physical
        return 64 * 1024 * 1024, 96 * 1024 * 1024
    return 20 * 1024 * 1024, 32 * 1024 * 1024             # v7x-style 64 MiB (or unknown)


def _pick_row_tile(hw, per_tile_bytes, budget):
    """Largest pixel tile that fits the VMEM budget and keeps the pipeline fed."""
    cands = (4096, 2048, 1024, 512, 256, 128)
    for min_steps in (4, 2, 1):                           # prefer >=4 steps (v7x: 2 TCs)
        for tm in cands:
            if tm > _round_up(hw, _LANE):
                continue
            if pl.cdiv(hw, tm) >= min_steps and per_tile_bytes(tm) <= budget:
                return tm
    return 128


# ---------------------------------------------------------------------------
# Kernel A: bottleneck eval-BN + ReLU + 1x1 conv  ->  z (bf16)  +  all adaptive
# avg-pools of every pyramid level accumulated in a resident output block.
# Layout: channels on sublanes, pixels on lanes.
# ---------------------------------------------------------------------------
def _make_bottleneck_pool_kernel(cin, use_mxu):
    def kernel(x_ref, s_ref, b_ref, w_ref, pt_ref, z_ref, pool_ref):
        # BN + ReLU in f32 on the VPU (v5e has no bf16 VALU).
        y = jnp.maximum(x_ref[0] * s_ref[...] + b_ref[...], 0.0)        # (Cin, tm)
        if use_mxu:
            z = jnp.dot(w_ref[...], y.astype(jnp.bfloat16),
                        preferred_element_type=jnp.float32)             # (Cb_p, tm)
        else:
            # tiny Cin (e.g. 4): unrolled VPU outer-product accumulate instead of a
            # pathological K=Cin MXU matmul.
            z = w_ref[:, 0:1] * y[0:1, :]
            for k in range(1, cin):
                z = z + w_ref[:, k:k + 1] * y[k:k + 1, :]
        zb = z.astype(jnp.bfloat16)
        z_ref[0] = zb                                                    # bf16 HBM stream

        # all pyramid levels' adaptive avg pools in one bf16 matmul per tile,
        # accumulated in the resident (per-batch) output block.
        @pl.when(pl.program_id(1) == 0)
        def _():
            pool_ref[...] = jnp.zeros_like(pool_ref)
        pool_ref[0] += jnp.dot(zb, pt_ref[...], preferred_element_type=jnp.float32)

    return kernel


# ---------------------------------------------------------------------------
# Kernel B: per-batch prologue = post-pool 1x1 convs of all levels (masked
# block-diagonally, fuse-BN scale folded in) into VMEM scratch; per row tile:
# one bilinear-upsample matmul for all levels + fuse BN+ReLU + one fuse matmul.
# ---------------------------------------------------------------------------
def _fuse_kernel(z_ref, pool_ref, wup_ref, sz_ref, bz_ref,
                 spost_ref, bpost_ref, wpost_ref, msk_ref, blvl_ref, wfuse_ref,
                 o_ref, post_sc):
    @pl.when(pl.program_id(1) == 0)
    def _():
        # post-pool BN+ReLU+conv for every level of this batch element (tiny).
        ap = jnp.maximum(pool_ref[0] * spost_ref[...] + bpost_ref[...], 0.0)
        post = jnp.dot(wpost_ref[...], ap.astype(jnp.bfloat16),
                       preferred_element_type=jnp.float32)               # (LCl_p, Ptot_p)
        # block-diagonal level mask * folded fuse-BN scale, stored bf16 for the MXU.
        post_sc[...] = (post * msk_ref[...]).astype(jnp.bfloat16)

    # fuse BN+ReLU on the bottleneck channels (f32 VPU).
    a_z = jnp.maximum(z_ref[0].astype(jnp.float32) * sz_ref[...] + bz_ref[...], 0.0)
    # bilinear upsample of ALL levels at once (fuse-BN scale already folded in).
    up = jnp.dot(post_sc[...], wup_ref[...], preferred_element_type=jnp.float32)
    a_l = jnp.maximum(up + blvl_ref[...], 0.0)                           # (LCl_p, tm)
    # single K = Cb_p + LCl_p fuse matmul over the (virtual) channel concat.
    act = jnp.concatenate([a_z, a_l], axis=0).astype(jnp.bfloat16)
    o_ref[0] = jnp.dot(wfuse_ref[...], act, preferred_element_type=jnp.float32)


# ---------------------------------------------------------------------------
# Static helper matrices (numpy, trace-time constants)
# ---------------------------------------------------------------------------
def _adaptive_pool_matrix(in_size, out_size):
    """A (out, in): adaptive_avg_pool1d as a matmul, PyTorch bin semantics."""
    A = np.zeros((out_size, in_size), np.float32)
    for i in range(out_size):
        start = (i * in_size) // out_size
        end = math.ceil((i + 1) * in_size / out_size)
        A[i, start:end] = 1.0 / (end - start)
    return A


def _bilinear_matrix(in_size, out_size):
    """U (out, in): bilinear interpolation weights, align_corners=False."""
    U = np.zeros((out_size, in_size), np.float32)
    scale = in_size / out_size
    for o in range(out_size):
        src = (o + 0.5) * scale - 0.5
        src = max(src, 0.0)
        i0 = min(int(math.floor(src)), in_size - 1)
        i1 = min(i0 + 1, in_size - 1)
        lam = src - i0
        U[o, i0] += 1.0 - lam
        U[o, i1] += lam
    return U


# ---------------------------------------------------------------------------
# Parameter init (deterministic, synthetic) + BN folding (eval mode, eps=1e-5)
# ---------------------------------------------------------------------------
def _init_bn_relu_conv(key, cin, cout):
    k1, k2, k3, k4, k5 = jax.random.split(key, 5)
    gamma = jax.random.uniform(k1, (cin,), jnp.float32, 0.5, 1.5)
    beta = 0.1 * jax.random.normal(k2, (cin,), jnp.float32)
    mean = 0.1 * jax.random.normal(k3, (cin,), jnp.float32)
    var = jax.random.uniform(k4, (cin,), jnp.float32, 0.5, 1.5)
    w = jax.random.normal(k5, (cin, cout), jnp.float32) / math.sqrt(cin)  # conv W^T
    scale = gamma / jnp.sqrt(var + 1e-5)
    shift = beta - mean * scale
    return dict(scale=scale, shift=shift, w=w)


def init_spp_params(key, num_maps_in, bottleneck_size, level_size, out_size, grids):
    keys = jax.random.split(key, 2 + len(grids))
    return {
        "bottleneck": _init_bn_relu_conv(keys[0], num_maps_in, bottleneck_size),
        "post": [_init_bn_relu_conv(keys[1 + i], bottleneck_size, level_size)
                 for i in range(len(grids))],
        "fuse": _init_bn_relu_conv(
            keys[-1], bottleneck_size + len(grids) * level_size, out_size),
    }


# ---------------------------------------------------------------------------
# Forward pass (matches PyTorch SpatialPyramidPooling.forward, eval-mode BN)
# ---------------------------------------------------------------------------
def spatial_pyramid_pooling(x, params, grids=(6, 3, 2, 1)):
    # TODO(synk): training-mode BatchNorm (batch statistics + running-stat updates)
    # is not implemented; BN uses inference semantics folded into scale/shift.
    N, C, H, W = x.shape
    HW = H * W
    ar = W / H
    Cb = params["bottleneck"]["w"].shape[1]
    Cl = params["post"][0]["w"].shape[1]
    Cout = params["fuse"]["w"].shape[1]
    L = len(grids)

    Cb_p = _round_up(Cb, 16)                 # bf16 sublane packing
    LCl_p = _round_up(L * Cl, 16)

    # pyramid geometry (trace-time)
    level_hw = [(g, max(1, round(ar * g))) for g in grids]
    cells = [gh * gw for gh, gw in level_hw]
    Ptot = sum(cells)
    Ptot_p = _round_up(Ptot, 16)

    budget, vmem_limit = _vmem_budget_and_limit()

    def _per_tile_bytes(tm):
        a = 2 * tm * (C * 4 + Cb_p * 2 + Ptot_p * 2)           # kernel A: x, z, P^T
        b = 2 * tm * (Cb_p * 2 + Ptot_p * 2 + Cout * 4)        # kernel B: z, Wup^T, out
        fixed = (4 * Cb_p * Ptot_p * 4 + 2 * LCl_p * Ptot_p * 2
                 + 2 * Cout * (Cb_p + LCl_p) * 2 + 64 * 1024)
        return max(a, b) + fixed

    tm = _pick_row_tile(HW, _per_tile_bytes, budget)
    HW_p = _round_up(HW, tm)
    T = HW_p // tm

    # ----- trace-time constant matrices (pooling + bilinear upsample) -----
    pool_blocks, up_blocks = [], []
    for gh, gw in level_hw:
        pool_blocks.append(np.kron(_adaptive_pool_matrix(H, gh),
                                   _adaptive_pool_matrix(W, gw)))        # (c_i, HW)
        up_blocks.append(np.kron(_bilinear_matrix(gh, H),
                                 _bilinear_matrix(gw, W)))               # (HW, c_i)
    PT = np.zeros((HW_p, Ptot_p), np.float32)        # pooled = z @ P^T
    WUPT = np.zeros((Ptot_p, HW_p), np.float32)      # up     = post @ Wup^T
    off = 0
    for pb_, ub_ in zip(pool_blocks, up_blocks):
        c = pb_.shape[0]
        PT[:HW, off:off + c] = pb_.T
        WUPT[off:off + c, :HW] = ub_.T
        off += c
    PT = jnp.asarray(PT, jnp.bfloat16)
    WUPT = jnp.asarray(WUPT, jnp.bfloat16)

    lvl_of_cell = np.zeros((Ptot_p,), np.int64)
    valid_cell = np.zeros((Ptot_p,), np.float32)
    off = 0
    for i, c in enumerate(cells):
        lvl_of_cell[off:off + c] = i
        valid_cell[off:off + c] = 1.0
        off += c

    # ----- packed parameters (channels-as-rows / transposed 1x1-conv weights) -----
    pb = params["bottleneck"]
    use_mxu = C > 16
    w_bott = jnp.transpose(pb["w"])                                      # (Cb, Cin)
    w_bott = jnp.pad(w_bott, ((0, Cb_p - Cb), (0, 0)))
    w_bott = w_bott.astype(jnp.bfloat16 if use_mxu else jnp.float32)
    s_in = pb["scale"].reshape(C, 1)
    b_in = pb["shift"].reshape(C, 1)

    # per-level post-pool folded-BN stats expanded to a tiny (Cb_p, Ptot_p) table
    s_post = jnp.pad(jnp.stack([p["scale"] for p in params["post"]]),
                     ((0, 0), (0, Cb_p - Cb)))                           # (L, Cb_p)
    b_post = jnp.pad(jnp.stack([p["shift"] for p in params["post"]]),
                     ((0, 0), (0, Cb_p - Cb)))
    cell_lvl = jnp.asarray(lvl_of_cell)
    vcell = jnp.asarray(valid_cell)
    S_post = s_post[cell_lvl].T                                          # (Cb_p, Ptot_p)
    B_post = (b_post[cell_lvl] * vcell[:, None]).T

    # post conv weights stacked along output rows: (LCl_p, Cb_p)
    w_post = jnp.concatenate([jnp.transpose(p["w"]) for p in params["post"]], axis=0)
    w_post = jnp.pad(w_post, ((0, LCl_p - L * Cl), (0, Cb_p - Cb))).astype(jnp.bfloat16)

    # fuse BN + block-diagonal level mask with fuse scale folded in
    pf = params["fuse"]
    row_lvl = np.arange(LCl_p) // max(Cl, 1)
    row_lvl[L * Cl:] = -1
    blockdiag = (row_lvl[:, None] == lvl_of_cell[None, :]).astype(np.float32)
    blockdiag *= valid_cell[None, :]
    s_fuse_lvl = jnp.pad(pf["scale"][Cb:Cb + L * Cl], (0, LCl_p - L * Cl))
    MS = jnp.asarray(blockdiag) * s_fuse_lvl[:, None]                    # (LCl_p, Ptot_p)
    b_fuse_lvl = jnp.pad(pf["shift"][Cb:Cb + L * Cl],
                         (0, LCl_p - L * Cl)).reshape(LCl_p, 1)
    s_fuse_z = jnp.pad(pf["scale"][:Cb], (0, Cb_p - Cb)).reshape(Cb_p, 1)
    b_fuse_z = jnp.pad(pf["shift"][:Cb], (0, Cb_p - Cb)).reshape(Cb_p, 1)

    wf_z = jnp.pad(jnp.transpose(pf["w"][:Cb, :]), ((0, 0), (0, Cb_p - Cb)))
    wf_l = jnp.pad(jnp.transpose(pf["w"][Cb:Cb + L * Cl, :]),
                   ((0, 0), (0, LCl_p - L * Cl)))
    w_fuse = jnp.concatenate([wf_z, wf_l], axis=1).astype(jnp.bfloat16)  # (Cout, K)
    K = Cb_p + LCl_p

    # ----- input: NCHW flattened, pixels on lanes (no transpose needed) -----
    x3 = x.reshape(N, C, HW).astype(jnp.float32)
    if HW_p != HW:
        x3 = jnp.pad(x3, ((0, 0), (0, 0), (0, HW_p - HW)))

    # ----- Kernel A: bottleneck + pooling accumulation -----
    cost_a = pl.CostEstimate(
        flops=int(2 * N * HW_p * (C * Cb_p + Cb_p * Ptot_p)),
        transcendentals=0,
        bytes_accessed=int(N * HW_p * (C * 4 + Cb_p * 2) + HW_p * Ptot_p * 2
                           + N * Cb_p * Ptot_p * 4))
    z3, pooled = pl.pallas_call(
        _make_bottleneck_pool_kernel(C, use_mxu),
        out_shape=(jax.ShapeDtypeStruct((N, Cb_p, HW_p), jnp.bfloat16),
                   jax.ShapeDtypeStruct((N, Cb_p, Ptot_p), jnp.float32)),
        grid=(N, T),
        in_specs=[
            pl.BlockSpec((1, C, tm), lambda n, t: (n, 0, t)),        # x tile
            pl.BlockSpec((C, 1), lambda n, t: (0, 0)),               # BN scale
            pl.BlockSpec((C, 1), lambda n, t: (0, 0)),               # BN shift
            pl.BlockSpec((Cb_p, C), lambda n, t: (0, 0)),            # conv weight
            pl.BlockSpec((tm, Ptot_p), lambda n, t: (t, 0)),         # pooling P^T tile
        ],
        out_specs=(pl.BlockSpec((1, Cb_p, tm), lambda n, t: (n, 0, t)),
                   pl.BlockSpec((1, Cb_p, Ptot_p), lambda n, t: (n, 0, 0))),
        compiler_params=pltpu.CompilerParams(
            dimension_semantics=("parallel", "arbitrary"),
            vmem_limit_bytes=vmem_limit),
        cost_estimate=cost_a,
    )(x3, s_in, b_in, w_bott, PT)

    # ----- Kernel B: post convs (prologue) + upsample + fuse -----
    cost_b = pl.CostEstimate(
        flops=int(2 * N * (Cb_p * LCl_p * Ptot_p
                           + HW_p * (LCl_p * Ptot_p + Cout * K))),
        transcendentals=0,
        bytes_accessed=int(N * HW_p * (Cb_p * 2 + Cout * 4)
                           + Ptot_p * HW_p * 2 + N * Cb_p * Ptot_p * 4))
    out3 = pl.pallas_call(
        _fuse_kernel,
        out_shape=jax.ShapeDtypeStruct((N, Cout, HW_p), jnp.float32),
        grid=(N, T),
        in_specs=[
            pl.BlockSpec((1, Cb_p, tm), lambda n, t: (n, 0, t)),      # z tile (bf16)
            pl.BlockSpec((1, Cb_p, Ptot_p), lambda n, t: (n, 0, 0)),  # pooled (resident)
            pl.BlockSpec((Ptot_p, tm), lambda n, t: (0, t)),          # Wup^T tile (bf16)
            pl.BlockSpec((Cb_p, 1), lambda n, t: (0, 0)),             # fuse scale (z chans)
            pl.BlockSpec((Cb_p, 1), lambda n, t: (0, 0)),             # fuse shift (z chans)
            pl.BlockSpec((Cb_p, Ptot_p), lambda n, t: (0, 0)),        # post BN scale table
            pl.BlockSpec((Cb_p, Ptot_p), lambda n, t: (0, 0)),        # post BN shift table
            pl.BlockSpec((LCl_p, Cb_p), lambda n, t: (0, 0)),         # post conv W (bf16)
            pl.BlockSpec((LCl_p, Ptot_p), lambda n, t: (0, 0)),       # level mask * scale
            pl.BlockSpec((LCl_p, 1), lambda n, t: (0, 0)),            # fuse shift (lvl chans)
            pl.BlockSpec((Cout, K), lambda n, t: (0, 0)),             # fuse conv W (bf16)
        ],
        out_specs=pl.BlockSpec((1, Cout, tm), lambda n, t: (n, 0, t)),
        scratch_shapes=[pltpu.VMEM((LCl_p, Ptot_p), jnp.bfloat16)],
        compiler_params=pltpu.CompilerParams(
            dimension_semantics=("parallel", "arbitrary"),
            vmem_limit_bytes=vmem_limit),
        cost_estimate=cost_b,
    )(z3, pooled, WUPT, s_fuse_z, b_fuse_z, S_post, B_post, w_post, MS,
      b_fuse_lvl, w_fuse)

    out = out3[:, :, :HW] if HW_p != HW else out3
    return out.reshape(N, Cout, H, W)                                    # NCHW directly


# ---------------------------------------------------------------------------
# Pure-JAX f32 reference (same eval-BN semantics, original forward structure)
# ---------------------------------------------------------------------------
def _spp_reference(x, params, grids):
    N, C, H, W = x.shape
    ar = W / H
    xf = jnp.transpose(x, (0, 2, 3, 1)).astype(jnp.float32)

    def bnreluconv(t, p):
        return jnp.dot(jnp.maximum(t * p["scale"] + p["shift"], 0.0), p["w"])

    z = bnreluconv(xf, params["bottleneck"])
    levels = [z]
    for i, g in enumerate(grids):
        gh, gw = g, max(1, round(ar * g))
        Ah = jnp.asarray(_adaptive_pool_matrix(H, gh))
        Aw = jnp.asarray(_adaptive_pool_matrix(W, gw))
        pooled = jnp.einsum("nhwc,ih,jw->nijc", z, Ah, Aw)
        lvl = bnreluconv(pooled, params["post"][i])
        Uh = jnp.asarray(_bilinear_matrix(gh, H))
        Uw = jnp.asarray(_bilinear_matrix(gw, W))
        levels.append(jnp.einsum("nijc,hi,wj->nhwc", lvl, Uh, Uw))
    cat = jnp.concatenate(levels, axis=-1)
    out = bnreluconv(cat, params["fuse"])
    return jnp.transpose(out, (0, 3, 1, 2))


# ---------------------------------------------------------------------------
if __name__ == "__main__":
    num_maps_in, bottleneck_size, level_size, out_size = 4, 64, 32, 32
    grids = (6, 3, 2, 1)

    key = jax.random.PRNGKey(0)
    k_x, k_p = jax.random.split(key)
    x = jax.random.normal(k_x, (2, num_maps_in, 16, 16), jnp.float32)    # NCHW input

    params = init_spp_params(k_p, num_maps_in, bottleneck_size, level_size,
                             out_size, grids)

    spp = jax.jit(spatial_pyramid_pooling, static_argnames=("grids",))
    out = jax.block_until_ready(spp(x, params, grids=grids))
    assert out.shape == (2, out_size, 16, 16), out.shape
    assert bool(jnp.all(jnp.isfinite(out)))

    # sanity-check the fused Pallas pipeline against the pure-JAX f32 reference
    # (bf16 MXU operands / bf16 z stream -> relative-error check).
    ref = _spp_reference(x, params, grids)
    rel_err = float(jnp.max(jnp.abs(out - ref)) / (jnp.max(jnp.abs(ref)) + 1e-6))
    assert rel_err < 6e-2, rel_err

    print("KERNEL_OK")
</pallas_src>

<mosaic_0001>
module attributes {stable_mosaic.version = 11 : i64} {
  func.func @kernel(%arg0: i32, %arg1: i32, %arg2: memref<1x4x128xf32, #tpu.memory_space<vmem>>, %arg3: memref<4x1xf32, #tpu.memory_space<vmem>>, %arg4: memref<4x1xf32, #tpu.memory_space<vmem>>, %arg5: memref<64x4xf32, #tpu.memory_space<vmem>>, %arg6: memref<128x64xbf16, #tpu.memory_space<vmem>>, %arg7: memref<1x64x128xbf16, #tpu.memory_space<vmem>>, %arg8: memref<1x64x64xf32, #tpu.memory_space<vmem>>) attributes {dimension_semantics = [#tpu.dimension_semantics<parallel>, #tpu.dimension_semantics<arbitrary>], iteration_bounds = array<i64: 2, 2>, scalar_prefetch = 0 : i64, scratch_operands = 0 : i64, tpu.core_type = #tpu.core_type<tc>, window_params = [{transform_indices = @transform_0, window_bounds = array<i64: 1, 4, 128>}, {pipeline_mode = #tpu.pipeline_mode<synchronous>, transform_indices = @transform_1, window_bounds = array<i64: 4, 1>}, {pipeline_mode = #tpu.pipeline_mode<synchronous>, transform_indices = @transform_2, window_bounds = array<i64: 4, 1>}, {pipeline_mode = #tpu.pipeline_mode<synchronous>, transform_indices = @transform_3, window_bounds = array<i64: 64, 4>}, {transform_indices = @transform_4, window_bounds = array<i64: 128, 64>}, {transform_indices = @transform_5, window_bounds = array<i64: 1, 64, 128>}, {transform_indices = @transform_6, window_bounds = array<i64: 1, 64, 64>}]} {
    %c0 = arith.constant 0 : index
    %c0_0 = arith.constant 0 : index
    %c0_1 = arith.constant 0 : index
    %0 = vector.load %arg2[%c0, %c0_0, %c0_1] : memref<1x4x128xf32, #tpu.memory_space<vmem>>, vector<1x4x128xf32>
    %1 = vector.shape_cast %0 : vector<1x4x128xf32> to vector<4x128xf32>
    %c0_2 = arith.constant 0 : index
    %c0_3 = arith.constant 0 : index
    %2 = vector.load %arg3[%c0_2, %c0_3] : memref<4x1xf32, #tpu.memory_space<vmem>>, vector<4x1xf32>
    %3 = vector.broadcast %2 : vector<4x1xf32> to vector<4x128xf32>
    %4 = arith.mulf %1, %3 : vector<4x128xf32>
    %c0_4 = arith.constant 0 : index
    %c0_5 = arith.constant 0 : index
    %5 = vector.load %arg4[%c0_4, %c0_5] : memref<4x1xf32, #tpu.memory_space<vmem>>, vector<4x1xf32>
    %6 = vector.broadcast %5 : vector<4x1xf32> to vector<4x128xf32>
    %7 = arith.addf %4, %6 : vector<4x128xf32>
    %cst = arith.constant 0.000000e+00 : f32
    %8 = vector.broadcast %cst : f32 to vector<4x128xf32>
    %9 = arith.maximumf %7, %8 : vector<4x128xf32>
    %c0_6 = arith.constant 0 : index
    %c0_7 = arith.constant 0 : index
    %10 = vector.load %arg5[%c0_6, %c0_7] : memref<64x4xf32, #tpu.memory_space<vmem>>, vector<64x1xf32>
    %11 = vector.extract_strided_slice %9 {offsets = [0, 0], sizes = [1, 128], strides = [1, 1]} : vector<4x128xf32> to vector<1x128xf32>
    %12 = vector.broadcast %10 : vector<64x1xf32> to vector<64x128xf32>
    %13 = vector.broadcast %11 : vector<1x128xf32> to vector<64x128xf32>
    %14 = arith.mulf %12, %13 : vector<64x128xf32>
    %c0_8 = arith.constant 0 : index
    %c1 = arith.constant 1 : index
    %15 = vector.load %arg5[%c0_8, %c1] : memref<64x4xf32, #tpu.memory_space<vmem>>, vector<64x1xf32>
    %16 = vector.extract_strided_slice %9 {offsets = [1, 0], sizes = [1, 128], strides = [1, 1]} : vector<4x128xf32> to vector<1x128xf32>
    %17 = vector.broadcast %15 : vector<64x1xf32> to vector<64x128xf32>
    %18 = vector.broadcast %16 : vector<1x128xf32> to vector<64x128xf32>
    %19 = arith.mulf %17, %18 : vector<64x128xf32>
    %20 = arith.addf %14, %19 : vector<64x128xf32>
    %c0_9 = arith.constant 0 : index
    %c2 = arith.constant 2 : index
    %21 = vector.load %arg5[%c0_9, %c2] : memref<64x4xf32, #tpu.memory_space<vmem>>, vector<64x1xf32>
    %22 = vector.extract_strided_slice %9 {offsets = [2, 0], sizes = [1, 128], strides = [1, 1]} : vector<4x128xf32> to vector<1x128xf32>
    %23 = vector.broadcast %21 : vector<64x1xf32> to vector<64x128xf32>
    %24 = vector.broadcast %22 : vector<1x128xf32> to vector<64x128xf32>
    %25 = arith.mulf %23, %24 : vector<64x128xf32>
    %26 = arith.addf %20, %25 : vector<64x128xf32>
    %c0_10 = arith.constant 0 : index
    %c3 = arith.constant 3 : index
    %27 = vector.load %arg5[%c0_10, %c3] : memref<64x4xf32, #tpu.memory_space<vmem>>, vector<64x1xf32>
    %28 = vector.extract_strided_slice %9 {offsets = [3, 0], sizes = [1, 128], strides = [1, 1]} : vector<4x128xf32> to vector<1x128xf32>
    %29 = vector.broadcast %27 : vector<64x1xf32> to vector<64x128xf32>
    %30 = vector.broadcast %28 : vector<1x128xf32> to vector<64x128xf32>
    %31 = arith.mulf %29, %30 : vector<64x128xf32>
    %32 = arith.addf %26, %31 : vector<64x128xf32>
    %33 = arith.truncf %32 : vector<64x128xf32> to vector<64x128xbf16>
    %c0_11 = arith.constant 0 : index
    %c0_12 = arith.constant 0 : index
    %c0_13 = arith.constant 0 : index
    %34 = vector.load %arg7[%c0_11, %c0_12, %c0_13] : memref<1x64x128xbf16, #tpu.memory_space<vmem>>, vector<1x64x128xbf16>
    %35 = vector.shape_cast %34 : vector<1x64x128xbf16> to vector<64x128xbf16>
    %36 = vector.shape_cast %33 : vector<64x128xbf16> to vector<1x64x128xbf16>
    tpu.vector_store %arg7[%c0_11, %c0_12, %c0_13], %36 {strides = array<i32>} : memref<1x64x128xbf16, #tpu.memory_space<vmem>>, vector<1x64x128xbf16>,
    %c0_i32 = arith.constant 0 : i32
    %37 = arith.cmpi eq, %arg1, %c0_i32 : i32
    %38 = arith.extui %37 : i1 to i32
    %c0_i32_14 = arith.constant 0 : i32
    %39 = arith.cmpi ne, %38, %c0_i32_14 : i32
    scf.if %39 {
      %cst_24 = arith.constant 0.000000e+00 : f32
      %48 = vector.broadcast %cst_24 : f32 to vector<1x64x64xf32>
      %c0_25 = arith.constant 0 : index
      %c0_26 = arith.constant 0 : index
      %c0_27 = arith.constant 0 : index
      %49 = vector.load %arg8[%c0_25, %c0_26, %c0_27] : memref<1x64x64xf32, #tpu.memory_space<vmem>>, vector<1x64x64xf32>
      tpu.vector_store %arg8[%c0_25, %c0_26, %c0_27], %48 {strides = array<i32>} : memref<1x64x64xf32, #tpu.memory_space<vmem>>, vector<1x64x64xf32>,
    } else {
    }
    %c0_15 = arith.constant 0 : index
    %c0_16 = arith.constant 0 : index
    %c0_17 = arith.constant 0 : index
    %40 = vector.load %arg8[%c0_15, %c0_16, %c0_17] : memref<1x64x64xf32, #tpu.memory_space<vmem>>, vector<1x64x64xf32>
    %41 = vector.shape_cast %40 : vector<1x64x64xf32> to vector<64x64xf32>
    %c0_18 = arith.constant 0 : index
    %c0_19 = arith.constant 0 : index
    %42 = vector.load %arg6[%c0_18, %c0_19] : memref<128x64xbf16, #tpu.memory_space<vmem>>, vector<128x64xbf16>
    %cst_20 = arith.constant dense<0.000000e+00> : vector<64x64xf32>
    %43 = tpu.matmul %33, %42, %cst_20 {dimension_numbers = #tpu.dot_dimension_numbers<[1], [0], [0], [1], [0, 0, 1, 1], [], []>} : vector<64x128xbf16>, vector<128x64xbf16>, vector<64x64xf32> -> vector<64x64xf32>
    %44 = arith.addf %41, %43 : vector<64x64xf32>
    %c0_21 = arith.constant 0 : index
    %c0_22 = arith.constant 0 : index
    %c0_23 = arith.constant 0 : index
    %45 = vector.load %arg8[%c0_21, %c0_22, %c0_23] : memref<1x64x64xf32, #tpu.memory_space<vmem>>, vector<1x64x64xf32>
    %46 = vector.shape_cast %45 : vector<1x64x64xf32> to vector<64x64xf32>
    %47 = vector.shape_cast %44 : vector<64x64xf32> to vector<1x64x64xf32>
    tpu.vector_store %arg8[%c0_21, %c0_22, %c0_23], %47 {strides = array<i32>} : memref<1x64x64xf32, #tpu.memory_space<vmem>>, vector<1x64x64xf32>,
    return
  }
  func.func @transform_0(%arg0: i32, %arg1: i32) -> (i32, i32, i32) {
    %c0_i32 = arith.constant 0 : i32
    %c0_i32_0 = arith.constant 0 : i32
    return %arg0, %c0_i32, %arg1 : i32, i32, i32
  }
  func.func @transform_1(%arg0: i32, %arg1: i32) -> (i32, i32) {
    %c0_i32 = arith.constant 0 : i32
    %c0_i32_0 = arith.constant 0 : i32
    %c0_i32_1 = arith.constant 0 : i32
    return %c0_i32, %c0_i32_0 : i32, i32
  }
  func.func @transform_2(%arg0: i32, %arg1: i32) -> (i32, i32) {
    %c0_i32 = arith.constant 0 : i32
    %c0_i32_0 = arith.constant 0 : i32
    %c0_i32_1 = arith.constant 0 : i32
    return %c0_i32, %c0_i32_0 : i32, i32
  }
  func.func @transform_3(%arg0: i32, %arg1: i32) -> (i32, i32) {
    %c0_i32 = arith.constant 0 : i32
    %c0_i32_0 = arith.constant 0 : i32
    %c0_i32_1 = arith.constant 0 : i32
    return %c0_i32, %c0_i32_0 : i32, i32
  }
  func.func @transform_4(%arg0: i32, %arg1: i32) -> (i32, i32) {
    %c0_i32 = arith.constant 0 : i32
    %c0_i32_0 = arith.constant 0 : i32
    return %arg1, %c0_i32 : i32, i32
  }
  func.func @transform_5(%arg0: i32, %arg1: i32) -> (i32, i32, i32) {
    %c0_i32 = arith.constant 0 : i32
    %c0_i32_0 = arith.constant 0 : i32
    return %arg0, %c0_i32, %arg1 : i32, i32, i32
  }
  func.func @transform_6(%arg0: i32, %arg1: i32) -> (i32, i32, i32) {
    %c0_i32 = arith.constant 0 : i32
    %c0_i32_0 = arith.constant 0 : i32
    %c0_i32_1 = arith.constant 0 : i32
    return %arg0, %c0_i32, %c0_i32_0 : i32, i32, i32
  }
}

module attributes {stable_mosaic.version = 11 : i64} {
  func.func @_fuse_kernel(%arg0: i32, %arg1: i32, %arg2: memref<1x64x128xbf16, #tpu.memory_space<vmem>>, %arg3: memref<1x64x64xf32, #tpu.memory_space<vmem>>, %arg4: memref<64x128xbf16, #tpu.memory_space<vmem>>, %arg5: memref<64x1xf32, #tpu.memory_space<vmem>>, %arg6: memref<64x1xf32, #tpu.memory_space<vmem>>, %arg7: memref<64x64xf32, #tpu.memory_space<vmem>>, %arg8: memref<64x64xf32, #tpu.memory_space<vmem>>, %arg9: memref<128x64xbf16, #tpu.memory_space<vmem>>, %arg10: memref<128x64xf32, #tpu.memory_space<vmem>>, %arg11: memref<128x1xf32, #tpu.memory_space<vmem>>, %arg12: memref<32x192xbf16, #tpu.memory_space<vmem>>, %arg13: memref<1x32x128xf32, #tpu.memory_space<vmem>>, %arg14: memref<128x64xbf16, #tpu.memory_space<vmem>>) attributes {dimension_semantics = [#tpu.dimension_semantics<parallel>, #tpu.dimension_semantics<arbitrary>], iteration_bounds = array<i64: 2, 2>, scalar_prefetch = 0 : i64, scratch_operands = 1 : i64, tpu.core_type = #tpu.core_type<tc>, window_params = [{transform_indices = @transform_0, window_bounds = array<i64: 1, 64, 128>}, {transform_indices = @transform_1, window_bounds = array<i64: 1, 64, 64>}, {transform_indices = @transform_2, window_bounds = array<i64: 64, 128>}, {pipeline_mode = #tpu.pipeline_mode<synchronous>, transform_indices = @transform_3, window_bounds = array<i64: 64, 1>}, {pipeline_mode = #tpu.pipeline_mode<synchronous>, transform_indices = @transform_4, window_bounds = array<i64: 64, 1>}, {pipeline_mode = #tpu.pipeline_mode<synchronous>, transform_indices = @transform_5, window_bounds = array<i64: 64, 64>}, {pipeline_mode = #tpu.pipeline_mode<synchronous>, transform_indices = @transform_6, window_bounds = array<i64: 64, 64>}, {pipeline_mode = #tpu.pipeline_mode<synchronous>, transform_indices = @transform_7, window_bounds = array<i64: 128, 64>}, {pipeline_mode = #tpu.pipeline_mode<synchronous>, transform_indices = @transform_8, window_bounds = array<i64: 128, 64>}, {pipeline_mode = #tpu.pipeline_mode<synchronous>, transform_indices = @transform_9, window_bounds = array<i64: 128, 1>}, {pipeline_mode = #tpu.pipeline_mode<synchronous>, transform_indices = @transform_10, window_bounds = array<i64: 32, 192>}, {transform_indices = @transform_11, window_bounds = array<i64: 1, 32, 128>}]} {
    %c0_i32 = arith.constant 0 : i32
    %0 = arith.cmpi eq, %arg1, %c0_i32 : i32
    %1 = arith.extui %0 : i1 to i32
    %c0_i32_0 = arith.constant 0 : i32
    %2 = arith.cmpi ne, %1, %c0_i32_0 : i32
    scf.if %2 {
      %c0_21 = arith.constant 0 : index
      %c0_22 = arith.constant 0 : index
      %c0_23 = arith.constant 0 : index
      %29 = vector.load %arg3[%c0_21, %c0_22, %c0_23] : memref<1x64x64xf32, #tpu.memory_space<vmem>>, vector<1x64x64xf32>
      %30 = vector.shape_cast %29 : vector<1x64x64xf32> to vector<64x64xf32>
      %c0_24 = arith.constant 0 : index
      %c0_25 = arith.constant 0 : index
      %31 = vector.load %arg7[%c0_24, %c0_25] : memref<64x64xf32, #tpu.memory_space<vmem>>, vector<64x64xf32>
      %32 = arith.mulf %30, %31 : vector<64x64xf32>
      %c0_26 = arith.constant 0 : index
      %c0_27 = arith.constant 0 : index
      %33 = vector.load %arg8[%c0_26, %c0_27] : memref<64x64xf32, #tpu.memory_space<vmem>>, vector<64x64xf32>
      %34 = arith.addf %32, %33 : vector<64x64xf32>
      %cst_28 = arith.constant 0.000000e+00 : f32
      %35 = vector.broadcast %cst_28 : f32 to vector<64x64xf32>
      %36 = arith.maximumf %34, %35 : vector<64x64xf32>
      %c0_29 = arith.constant 0 : index
      %c0_30 = arith.constant 0 : index
      %37 = vector.load %arg9[%c0_29, %c0_30] : memref<128x64xbf16, #tpu.memory_space<vmem>>, vector<128x64xbf16>
      %38 = arith.truncf %36 : vector<64x64xf32> to vector<64x64xbf16>
      %cst_31 = arith.constant dense<0.000000e+00> : vector<128x64xf32>
      %39 = tpu.matmul %37, %38, %cst_31 {dimension_numbers = #tpu.dot_dimension_numbers<[1], [0], [0], [1], [0, 0, 1, 1], [], []>} : vector<128x64xbf16>, vector<64x64xbf16>, vector<128x64xf32> -> vector<128x64xf32>
      %c0_32 = arith.constant 0 : index
      %c0_33 = arith.constant 0 : index
      %40 = vector.load %arg10[%c0_32, %c0_33] : memref<128x64xf32, #tpu.memory_space<vmem>>, vector<128x64xf32>
      %41 = arith.mulf %39, %40 : vector<128x64xf32>
      %42 = arith.truncf %41 : vector<128x64xf32> to vector<128x64xbf16>
      %c0_34 = arith.constant 0 : index
      %c0_35 = arith.constant 0 : index
      %43 = vector.load %arg14[%c0_34, %c0_35] : memref<128x64xbf16, #tpu.memory_space<vmem>>, vector<128x64xbf16>
      tpu.vector_store %arg14[%c0_34, %c0_35], %42 {strides = array<i32>} : memref<128x64xbf16, #tpu.memory_space<vmem>>, vector<128x64xbf16>,
    } else {
    }
    %c0 = arith.constant 0 : index
    %c0_1 = arith.constant 0 : index
    %c0_2 = arith.constant 0 : index
    %3 = vector.load %arg2[%c0, %c0_1, %c0_2] : memref<1x64x128xbf16, #tpu.memory_space<vmem>>, vector<1x64x128xbf16>
    %4 = vector.shape_cast %3 : vector<1x64x128xbf16> to vector<64x128xbf16>
    %5 = arith.extf %4 : vector<64x128xbf16> to vector<64x128xf32>
    %c0_3 = arith.constant 0 : index
    %c0_4 = arith.constant 0 : index
    %6 = vector.load %arg5[%c0_3, %c0_4] : memref<64x1xf32, #tpu.memory_space<vmem>>, vector<64x1xf32>
    %7 = vector.broadcast %6 : vector<64x1xf32> to vector<64x128xf32>
    %8 = arith.mulf %5, %7 : vector<64x128xf32>
    %c0_5 = arith.constant 0 : index
    %c0_6 = arith.constant 0 : index
    %9 = vector.load %arg6[%c0_5, %c0_6] : memref<64x1xf32, #tpu.memory_space<vmem>>, vector<64x1xf32>
    %10 = vector.broadcast %9 : vector<64x1xf32> to vector<64x128xf32>
    %11 = arith.addf %8, %10 : vector<64x128xf32>
    %cst = arith.constant 0.000000e+00 : f32
    %12 = vector.broadcast %cst : f32 to vector<64x128xf32>
    %13 = arith.maximumf %11, %12 : vector<64x128xf32>
    %c0_7 = arith.constant 0 : index
    %c0_8 = arith.constant 0 : index
    %14 = vector.load %arg14[%c0_7, %c0_8] : memref<128x64xbf16, #tpu.memory_space<vmem>>, vector<128x64xbf16>
    %c0_9 = arith.constant 0 : index
    %c0_10 = arith.constant 0 : index
    %15 = vector.load %arg4[%c0_9, %c0_10] : memref<64x128xbf16, #tpu.memory_space<vmem>>, vector<64x128xbf16>
    %cst_11 = arith.constant dense<0.000000e+00> : vector<128x128xf32>
    %16 = tpu.matmul %14, %15, %cst_11 {dimension_numbers = #tpu.dot_dimension_numbers<[1], [0], [0], [1], [0, 0, 1, 1], [], []>} : vector<128x64xbf16>, vector<64x128xbf16>, vector<128x128xf32> -> vector<128x128xf32>
    %c0_12 = arith.constant 0 : index
    %c0_13 = arith.constant 0 : index
    %17 = vector.load %arg11[%c0_12, %c0_13] : memref<128x1xf32, #tpu.memory_space<vmem>>, vector<128x1xf32>
    %18 = vector.broadcast %17 : vector<128x1xf32> to vector<128x128xf32>
    %19 = arith.addf %16, %18 : vector<128x128xf32>
    %cst_14 = arith.constant 0.000000e+00 : f32
    %20 = vector.broadcast %cst_14 : f32 to vector<128x128xf32>
    %21 = arith.maximumf %19, %20 : vector<128x128xf32>
    %22 = tpu.concatenate %13, %21 in 0 : vector<64x128xf32>, vector<128x128xf32> -> vector<192x128xf32>
    %23 = arith.truncf %22 : vector<192x128xf32> to vector<192x128xbf16>
    %c0_15 = arith.constant 0 : index
    %c0_16 = arith.constant 0 : index
    %24 = vector.load %arg12[%c0_15, %c0_16] : memref<32x192xbf16, #tpu.memory_space<vmem>>, vector<32x192xbf16>
    %cst_17 = arith.constant dense<0.000000e+00> : vector<32x128xf32>
    %25 = tpu.matmul %24, %23, %cst_17 {dimension_numbers = #tpu.dot_dimension_numbers<[1], [0], [0], [1], [0, 0, 1, 1], [], []>} : vector<32x192xbf16>, vector<192x128xbf16>, vector<32x128xf32> -> vector<32x128xf32>
    %c0_18 = arith.constant 0 : index
    %c0_19 = arith.constant 0 : index
    %c0_20 = arith.constant 0 : index
    %26 = vector.load %arg13[%c0_18, %c0_19, %c0_20] : memref<1x32x128xf32, #tpu.memory_space<vmem>>, vector<1x32x128xf32>
    %27 = vector.shape_cast %26 : vector<1x32x128xf32> to vector<32x128xf32>
    %28 = vector.shape_cast %25 : vector<32x128xf32> to vector<1x32x128xf32>
    tpu.vector_store %arg13[%c0_18, %c0_19, %c0_20], %28 {strides = array<i32>} : memref<1x32x128xf32, #tpu.memory_space<vmem>>, vector<1x32x128xf32>,
    return
  }
  func.func @transform_0(%arg0: i32, %arg1: i32) -> (i32, i32, i32) {
    %c0_i32 = arith.constant 0 : i32
    %c0_i32_0 = arith.constant 0 : i32
    return %arg0, %c0_i32, %arg1 : i32, i32, i32
  }
  func.func @transform_1(%arg0: i32, %arg1: i32) -> (i32, i32, i32) {
    %c0_i32 = arith.constant 0 : i32
    %c0_i32_0 = arith.constant 0 : i32
    %c0_i32_1 = arith.constant 0 : i32
    return %arg0, %c0_i32, %c0_i32_0 : i32, i32, i32
  }
  func.func @transform_2(%arg0: i32, %arg1: i32) -> (i32, i32) {
    %c0_i32 = arith.constant 0 : i32
    %c0_i32_0 = arith.constant 0 : i32
    return %c0_i32, %arg1 : i32, i32
  }
  func.func @transform_3(%arg0: i32, %arg1: i32) -> (i32, i32) {
    %c0_i32 = arith.constant 0 : i32
    %c0_i32_0 = arith.constant 0 : i32
    %c0_i32_1 = arith.constant 0 : i32
    return %c0_i32, %c0_i32_0 : i32, i32
  }
  func.func @transform_4(%arg0: i32, %arg1: i32) -> (i32, i32) {
    %c0_i32 = arith.constant 0 : i32
    %c0_i32_0 = arith.constant 0 : i32
    %c0_i32_1 = arith.constant 0 : i32
    return %c0_i32, %c0_i32_0 : i32, i32
  }
  func.func @transform_5(%arg0: i32, %arg1: i32) -> (i32, i32) {
    %c0_i32 = arith.constant 0 : i32
    %c0_i32_0 = arith.constant 0 : i32
    %c0_i32_1 = arith.constant 0 : i32
    return %c0_i32, %c0_i32_0 : i32, i32
  }
  func.func @transform_6(%arg0: i32, %arg1: i32) -> (i32, i32) {
    %c0_i32 = arith.constant 0 : i32
    %c0_i32_0 = arith.constant 0 : i32
    %c0_i32_1 = arith.constant 0 : i32
    return %c0_i32, %c0_i32_0 : i32, i32
  }
  func.func @transform_7(%arg0: i32, %arg1: i32) -> (i32, i32) {
    %c0_i32 = arith.constant 0 : i32
    %c0_i32_0 = arith.constant 0 : i32
    %c0_i32_1 = arith.constant 0 : i32
    return %c0_i32, %c0_i32_0 : i32, i32
  }
  func.func @transform_8(%arg0: i32, %arg1: i32) -> (i32, i32) {
    %c0_i32 = arith.constant 0 : i32
    %c0_i32_0 = arith.constant 0 : i32
    %c0_i32_1 = arith.constant 0 : i32
    return %c0_i32, %c0_i32_0 : i32, i32
  }
  func.func @transform_9(%arg0: i32, %arg1: i32) -> (i32, i32) {
    %c0_i32 = arith.constant 0 : i32
    %c0_i32_0 = arith.constant 0 : i32
    %c0_i32_1 = arith.constant 0 : i32
    return %c0_i32, %c0_i32_0 : i32, i32
  }
  func.func @transform_10(%arg0: i32, %arg1: i32) -> (i32, i32) {
    %c0_i32 = arith.constant 0 : i32
    %c0_i32_0 = arith.constant 0 : i32
    %c0_i32_1 = arith.constant 0 : i32
    return %c0_i32, %c0_i32_0 : i32, i32
  }
  func.func @transform_11(%arg0: i32, %arg1: i32) -> (i32, i32, i32) {
    %c0_i32 = arith.constant 0 : i32
    %c0_i32_0 = arith.constant 0 : i32
    return %arg0, %c0_i32, %arg1 : i32, i32, i32
  }
}

</mosaic_0001>

<llo_original>
// kernel: spatial_pyramid_pooling.2
$region0: #{spatial_pyramid_pooling.2}
  #allocation0 [shape = 'u32[]', space=smem, size = 0x4, offset = 0x4, fixed_abs, tag = 'smem constant byte address 0x4 - core index']
  #allocation1 [shape = 'u32[72,128]{1,0:T(1,128)}', space=vmem, size = 0x9000, scoped, tag = 'internal scratch']
  %s0 = inlined_call_operand.vmem [shape: f32[2,4,256], index: 0, kind: input, shape index: {}]
  %s1 = inlined_call_operand.vmem [shape: f32[4,1], index: 1, kind: input, shape index: {}]
  %s2 = inlined_call_operand.vmem [shape: f32[4,1], index: 2, kind: input, shape index: {}]
  %s3 = inlined_call_operand.vmem [shape: f32[64,4], index: 3, kind: input, shape index: {}]
  %s4 = inlined_call_operand.vmem [shape: bf16[256,64], index: 4, kind: input, shape index: {}]
  %s5 = inlined_call_operand.vmem [shape: bf16[2,64,256], index: 5, kind: output, shape index: {0}]
  %s6 = inlined_call_operand.vmem [shape: f32[2,64,64], index: 6, kind: output, shape index: {1}]
  %7 = xla_tuple %s5, %s6
  %s8 = sld [smem:[#allocation0]]
  $region102: #{spatial_pyramid_pooling.2} parent=0
    _
  %s10 = ssub.s32 1, %s8
  %s11 = scalar_select 0, %s10, %s8
  $region1: #{spatial_pyramid_pooling.2} parent=0
    #allocation2 [shape = 'u8[32768]{0}', space=vmem, size = 0x8000, scoped, tag = 'output window, operand 0']
    loop: start=0, step=1, limit=6
    $region2: #{spatial_pyramid_pooling.2} parent=1 // loop_pre_header
      _
    $region3: #{spatial_pyramid_pooling.2} parent=1 // loop_header
      %s13 = sphi 0, %s17
      %p14 = scmp.ge.s32.totalorder %s13, 6
      %s20 = sphi 0, %s32
      %s21 = sphi 0, %s28
      %s22 = sphi 0, %s20
      %s23 = sphi 0, %s21
      %s24 = sphi 0, %s22
      %s25 = sphi 0, %s23
      %s37 = sphi 0, %s39
      %s40 = sphi 0, %s37
      %s41 = sphi 0, %s40
      %s57 = sphi 0, %s41
      %s61 = sphi 0, %s61
      %s63 = sphi 0, %s61
      %s64 = sphi 0, %s63
      %s78 = sphi 0, %s64
      %s82 = sphi 0, %s82
      %s84 = sphi 0, %s82
      %s85 = sphi 0, %s84
      %s99 = sphi 0, %s85
      %s103 = sphi 0, %s103
      %s105 = sphi 0, %s103
      %s106 = sphi 0, %s105
      %s120 = sphi 0, %s106
      %s126 = sphi 0, %s128
      %s129 = sphi 0, %s126
      %s130 = sphi 0, %s129
      %s146 = sphi 0, %s130
      %s154 = sphi 0, %s156
      %s157 = sphi 0, %s154
      %s158 = sphi 0, %s157
      %s174 = sphi 0, %s158
      %s180 = sphi 0, %s182
      %s183 = sphi 0, %s180
      %s184 = sphi 0, %s183
      %s200 = sphi 0, %s184
    $region4: #{spatial_pyramid_pooling.2} parent=1 // loop_header_branch
      %16 = sbr.rel (%p14) target = $region8
    $region5: #{spatial_pyramid_pooling.2} parent=1 // loop_body
      %s18 = ssub.s32 %s13, 1
      %s19 = ssub.s32 %s13, 2
      %s26 = sadd.s32 1, %s21
      %p27 = scmp.ge.s32.totalorder %s26, 2
      %s28 = scalar_select %p27, 0, %s26
      %s29 = sadd.s32 1, %s20
      %s30 = scalar_select %p27, %s29, %s20
      %p31 = scmp.ge.s32.totalorder %s30, 2
      %s32 = scalar_select %p31, 0, %s30
      %s33 = ssub.s32 %s20, %s32
      %s34 = ssub.s32 %s21, %s28
      %s35 = sor.u32 %s33, %s34
      %p36 = scmp.eq.s32.totalorder %s35, 0
      %s38 = sadd.s32 %s37, 1
      %s39 = scalar_select %p36, %s37, %s38
      %p42 = pneg %p36
      %p43 = scmp.eq.s32.totalorder %s13, 3
      %p44 = por %p42, %p43
      %p45 = scmp.ne.s32.totalorder %s37, %s40
      %p46 = scmp.eq.s32.totalorder %s13, 0
      %p47 = por %p45, %p46
      %p48 = scmp.ne.s32.totalorder %s37, %s40
      %p49 = scmp.eq.s32.totalorder %s18, 3
      %p50 = por %p48, %p49
      %p51 = scmp.ne.s32.totalorder %s40, %s41
      %p52 = scmp.eq.s32.totalorder %s18, 0
      %p53 = por %p51, %p52
      %p54 = scmp.ne.s32.totalorder %s40, %s41
      %p55 = scmp.eq.s32.totalorder %s19, 3
      %p56 = por %p54, %p55
      %p58 = scmp.ne.s32.totalorder %s41, %s57
      %p59 = scmp.eq.s32.totalorder %s19, 0
      %p60 = por %p58, %p59
      %s62 = sadd.s32 %s61, 1
      %p65 = scmp.eq.s32.totalorder %s13, 3
      %p66 = scmp.ne.s32.totalorder %s61, %s63
      %p67 = scmp.eq.s32.totalorder %s13, 0
      %p68 = por %p66, %p67
      %p69 = scmp.ne.s32.totalorder %s61, %s63
      %p70 = scmp.eq.s32.totalorder %s18, 3
      %p71 = por %p69, %p70
      %p72 = scmp.ne.s32.totalorder %s63, %s64
      %p73 = scmp.eq.s32.totalorder %s18, 0
      %p74 = por %p72, %p73
      %p75 = scmp.ne.s32.totalorder %s63, %s64
      %p76 = scmp.eq.s32.totalorder %s19, 3
      %p77 = por %p75, %p76
      %p79 = scmp.ne.s32.totalorder %s64, %s78
      %p80 = scmp.eq.s32.totalorder %s19, 0
      %p81 = por %p79, %p80
      %s83 = sadd.s32 %s82, 1
      %p86 = scmp.eq.s32.totalorder %s13, 3
      %p87 = scmp.ne.s32.totalorder %s82, %s84
      %p88 = scmp.eq.s32.totalorder %s13, 0
      %p89 = por %p87, %p88
      %p90 = scmp.ne.s32.totalorder %s82, %s84
      %p91 = scmp.eq.s32.totalorder %s18, 3
      %p92 = por %p90, %p91
      %p93 = scmp.ne.s32.totalorder %s84, %s85
      %p94 = scmp.eq.s32.totalorder %s18, 0
      %p95 = por %p93, %p94
      %p96 = scmp.ne.s32.totalorder %s84, %s85
      %p97 = scmp.eq.s32.totalorder %s19, 3
      %p98 = por %p96, %p97
      %p100 = scmp.ne.s32.totalorder %s85, %s99
      %p101 = scmp.eq.s32.totalorder %s19, 0
      %p102 = por %p100, %p101
      %s104 = sadd.s32 %s103, 1
      %p107 = scmp.eq.s32.totalorder %s13, 3
      %p108 = scmp.ne.s32.totalorder %s103, %s105
      %p109 = scmp.eq.s32.totalorder %s13, 0
      %p110 = por %p108, %p109
      %p111 = scmp.ne.s32.totalorder %s103, %s105
      %p112 = scmp.eq.s32.totalorder %s18, 3
      %p113 = por %p111, %p112
      %p114 = scmp.ne.s32.totalorder %s105, %s106
      %p115 = scmp.eq.s32.totalorder %s18, 0
      %p116 = por %p114, %p115
      %p117 = scmp.ne.s32.totalorder %s105, %s106
      %p118 = scmp.eq.s32.totalorder %s19, 3
      %p119 = por %p117, %p118
      %p121 = scmp.ne.s32.totalorder %s106, %s120
      %p122 = scmp.eq.s32.totalorder %s19, 0
      %p123 = por %p121, %p122
      %s124 = ssub.s32 %s21, %s28
      %p125 = scmp.eq.s32.totalorder %s124, 0
      %s127 = sadd.s32 %s126, 1
      %s128 = scalar_select %p125, %s126, %s127
      %p131 = pneg %p125
      %p132 = scmp.eq.s32.totalorder %s13, 3
      %p133 = por %p131, %p132
      %p134 = scmp.ne.s32.totalorder %s126, %s129
      %p135 = scmp.eq.s32.totalorder %s13, 0
      %p136 = por %p134, %p135
      %p137 = scmp.ne.s32.totalorder %s126, %s129
      %p138 = scmp.eq.s32.totalorder %s18, 3
      %p139 = por %p137, %p138
      %p140 = scmp.ne.s32.totalorder %s129, %s130
      %p141 = scmp.eq.s32.totalorder %s18, 0
      %p142 = por %p140, %p141
      %p143 = scmp.ne.s32.totalorder %s129, %s130
      %p144 = scmp.eq.s32.totalorder %s19, 3
      %p145 = por %p143, %p144
      %p147 = scmp.ne.s32.totalorder %s130, %s146
      %p148 = scmp.eq.s32.totalorder %s19, 0
      %p149 = por %p147, %p148
      %s150 = ssub.s32 %s20, %s32
      %s151 = ssub.s32 %s21, %s28
      %s152 = sor.u32 %s150, %s151
      %p153 = scmp.eq.s32.totalorder %s152, 0
      %s155 = sadd.s32 %s154, 1
      %s156 = scalar_select %p153, %s154, %s155
      %p159 = pneg %p153
      %p160 = scmp.eq.s32.totalorder %s13, 3
      %p161 = por %p159, %p160
      %p162 = scmp.ne.s32.totalorder %s154, %s157
      %p163 = scmp.eq.s32.totalorder %s13, 0
      %p164 = por %p162, %p163
      %p165 = scmp.ne.s32.totalorder %s154, %s157
      %p166 = scmp.eq.s32.totalorder %s18, 3
      %p167 = por %p165, %p166
      %p168 = scmp.ne.s32.totalorder %s157, %s158
      %p169 = scmp.eq.s32.totalorder %s18, 0
      %p170 = por %p168, %p169
      %p171 = scmp.ne.s32.totalorder %s157, %s158
      %p172 = scmp.eq.s32.totalorder %s19, 3
      %p173 = por %p171, %p172
      %p175 = scmp.ne.s32.totalorder %s158, %s174
      %p176 = scmp.eq.s32.totalorder %s19, 0
      %p177 = por %p175, %p176
      %s178 = ssub.s32 %s20, %s32
      %p179 = scmp.eq.s32.totalorder %s178, 0
      %s181 = sadd.s32 %s180, 1
      %s182 = scalar_select %p179, %s180, %s181
      %p185 = pneg %p179
      %p186 = scmp.eq.s32.totalorder %s13, 3
      %p187 = por %p185, %p186
      %p188 = scmp.ne.s32.totalorder %s180, %s183
      %p189 = scmp.eq.s32.totalorder %s13, 0
      %p190 = por %p188, %p189
      %p191 = scmp.ne.s32.totalorder %s180, %s183
      %p192 = scmp.eq.s32.totalorder %s18, 3
      %p193 = por %p191, %p192
      %p194 = scmp.ne.s32.totalorder %s183, %s184
      %p195 = scmp.eq.s32.totalorder %s18, 0
      %p196 = por %p194, %p195
      %p197 = scmp.ne.s32.totalorder %s183, %s184
      %p198 = scmp.eq.s32.totalorder %s19, 3
      %p199 = por %p197, %p198
      %p201 = scmp.ne.s32.totalorder %s184, %s200
      %p202 = scmp.eq.s32.totalorder %s19, 0
      %p203 = por %p201, %p202
      %p204 = scmp.le.s32.totalorder 1, %s13
      %p205 = scmp.lt.s32.totalorder %s13, 5
      %p206 = pnand %p204, %p205
      %p207 = pneg %p206
      // Predicated region
      $region9: #{spatial_pyramid_pooling.2} parent=5 // pred_check
        _
      $region10: #{spatial_pyramid_pooling.2} parent=5 // pred_check_branch
        %209 = sbr.rel (%p206) target = $region12
      $region11: #{spatial_pyramid_pooling.2} parent=5 // pred_region
        %s210 = ssub.s32 %s13, 1
        // Predicated region
        $region13: #{spatial_pyramid_pooling.2} parent=11 // pred_check
          %p211 = pneg %p74
        $region14: #{spatial_pyramid_pooling.2} parent=11 // pred_check_branch
          %213 = sbr.rel (%p211) target = $region16
        $region15: #{spatial_pyramid_pooling.2} parent=11 // pred_region
          _
        $region16: #{spatial_pyramid_pooling.2} parent=11 // pred_fallthru
          _
        // Predicated region
        $region17: #{spatial_pyramid_pooling.2} parent=11 // pred_check
          %p214 = pneg %p95
        $region18: #{spatial_pyramid_pooling.2} parent=11 // pred_check_branch
          %216 = sbr.rel (%p214) target = $region20
        $region19: #{spatial_pyramid_pooling.2} parent=11 // pred_region
          _
        $region20: #{spatial_pyramid_pooling.2} parent=11 // pred_fallthru
          _
        // Predicated region
        $region21: #{spatial_pyramid_pooling.2} parent=11 // pred_check
          %p217 = pneg %p116
        $region22: #{spatial_pyramid_pooling.2} parent=11 // pred_check_branch
          %219 = sbr.rel (%p217) target = $region24
        $region23: #{spatial_pyramid_pooling.2} parent=11 // pred_region
          _
        $region24: #{spatial_pyramid_pooling.2} parent=11 // pred_fallthru
          _
      $region12: #{spatial_pyramid_pooling.2} parent=5 // pred_fallthru
        _
      %p220 = scmp.lt.s32.totalorder %s13, 4
      // Predicated region
      $region25: #{spatial_pyramid_pooling.2} parent=5 // pred_check
        %p221 = pneg %p220
      $region26: #{spatial_pyramid_pooling.2} parent=5 // pred_check_branch
        %223 = sbr.rel (%p221) target = $region28
      $region27: #{spatial_pyramid_pooling.2} parent=5 // pred_region
        // Predicated region
        $region29: #{spatial_pyramid_pooling.2} parent=27 // pred_check
          %p224 = pneg %p47
        $region30: #{spatial_pyramid_pooling.2} parent=27 // pred_check_branch
          %226 = sbr.rel (%p224) target = $region32
        $region31: #{spatial_pyramid_pooling.2} parent=27 // pred_region
          %p227 = scmp.lt.s32.totalorder %s20, 1
          %s228 = scalar_select %p227, %s20, 1
          %p229 = scmp.lt.s32.totalorder %s21, 1
          %s230 = scalar_select %p229, %s21, 1
          %s231 = smul.addr %s228, 2
          %s232 = sadd.s32 %s230, %s231
          %s233 = smul.addr %s232, 4
          %s234 = scalar_lea.vmem %s0, %s233
        $region32: #{spatial_pyramid_pooling.2} parent=27 // pred_fallthru
          _
        // Predicated region
        $region33: #{spatial_pyramid_pooling.2} parent=27 // pred_check
          %p235 = pneg %p136
        $region34: #{spatial_pyramid_pooling.2} parent=27 // pred_check_branch
          %237 = sbr.rel (%p235) target = $region36
        $region35: #{spatial_pyramid_pooling.2} parent=27 // pred_region
          %s238 = smul.u32 16, %s21
          %p239 = scmp.lt.s32.totalorder %s238, 31
          %s240 = scalar_select %p239, %s238, 31
          %s241 = smul.addr %s240, 4
          %s242 = scalar_lea.vmem %s4, %s241
          %s243 = smul.u32 16, %s21
        $region36: #{spatial_pyramid_pooling.2} parent=27 // pred_fallthru
          _
      $region28: #{spatial_pyramid_pooling.2} parent=5 // pred_fallthru
        _
      %p244 = scmp.le.s32.totalorder 1, %s13
      %p245 = scmp.lt.s32.totalorder %s13, 5
      %p246 = pnand %p244, %p245
      %p247 = pneg %p246
      // Predicated region
      $region37: #{spatial_pyramid_pooling.2} parent=5 // pred_check
        _
      $region38: #{spatial_pyramid_pooling.2} parent=5 // pred_check_branch
        %249 = sbr.rel (%p246) target = $region40
      $region39: #{spatial_pyramid_pooling.2} parent=5 // pred_region
        %s250 = ssub.s32 %s13, 1
        %p251 = scmp.lt.s32.totalorder %s22, 1
        %s252 = scalar_select %p251, %s22, 1
        %p253 = scmp.lt.s32.totalorder %s23, 1
        %s254 = scalar_select %p253, %s23, 1
        %s255 = smul.addr %s252, 2
        %s256 = sadd.s32 %s254, %s255
        %s257 = smul.addr %s256, 4
        %s258 = scalar_lea.vmem %s0, %s257
        %p259 = pneg %p53
        %p260 = pneg %p50
        %p261 = pneg %p74
        %p262 = pneg %p71
        %p263 = pneg %p95
        %p264 = pneg %p92
        %p265 = pneg %p116
        %p266 = pneg %p113
        %s267 = smul.u32 16, %s23
        %p268 = scmp.lt.s32.totalorder %s267, 31
        %s269 = scalar_select %p268, %s267, 31
        %s270 = smul.addr %s269, 4
        %s271 = scalar_lea.vmem %s4, %s270
        %p272 = pneg %p142
        %p273 = pneg %p139
        %p274 = pneg %p170
        %p275 = pneg %p167
        %s276 = sand.u32 %s157, 1
        %s277 = sand.u32 %s157, 1
        %s278 = smul.addr %s277, 32
        %s279 = scalar_lea.vmem [#allocation2], %s278
        %p280 = pneg %p196
        %p281 = pneg %p193
        %p282 = scmp.lt.s32.totalorder %s22, 1
        %s283 = scalar_select %p282, %s22, 1
        %s284 = smul.addr %s283, 8
        %s285 = smul.addr %s284, 8
        %s286 = scalar_lea.vmem %s6, %s285
        %p287 = scmp.lt.s32.totalorder %s22, 1
        %s288 = scalar_select %p287, %s22, 1
        %p289 = scmp.lt.s32.totalorder %s23, 1
        %s290 = scalar_select %p289, %s23, 1
        %s291 = smul.addr %s288, 2
        %s292 = sadd.s32 %s290, %s291
        %s293 = smul.addr %s292, 4
        %s294 = scalar_lea.vmem %s0, %s293
        %s295 = smul.u32 16, %s23
        %p296 = scmp.lt.s32.totalorder %s295, 31
        %s297 = scalar_select %p296, %s295, 31
        %s298 = smul.addr %s297, 4
        %s299 = scalar_lea.vmem %s4, %s298
        %s300 = smul.u32 16, %s23
        %p301 = scmp.lt.s32.totalorder %s22, 1
        %s302 = scalar_select %p301, %s22, 1
        %s303 = smul.addr %s302, 8
        %s304 = smul.addr %s303, 8
        %s305 = scalar_lea.vmem %s6, %s304
        %v306 = vld [vmem:[%s294] sm:$0xf]
        %v307 = vld [vmem:[%s1] sm:$0xf]
        %309 = vset.pattern.permute.xlu0 0
        %310 = vperm.xlu0 %309, %v307
        %v311 = vpop.permute.xlu0 %310
        %v313 = vmul.f32 %v306, %v311
        %v314 = vld [vmem:[%s2] sm:$0xf]
        %316 = vset.pattern.permute.xlu0 0
        %317 = vperm.xlu0 %316, %v314
        %v318 = vpop.permute.xlu0 %317
        %v320 = vadd.f32 %v313, %v318
        %v321 = vmax.f32 %v320, 0.0
        %v322 = vld [vmem:[%s3] sm:$0xff]
        %v323 = vld [vmem:[%s3 + $0x8] sm:$0xff]
        %v324 = vld [vmem:[%s3 + $0x10] sm:$0xff]
        %v325 = vld [vmem:[%s3 + $0x18] sm:$0xff]
        %v326 = vld [vmem:[%s3 + $0x20] sm:$0xff]
        %v327 = vld [vmem:[%s3 + $0x28] sm:$0xff]
        %v328 = vld [vmem:[%s3 + $0x30] sm:$0xff]
        %v329 = vld [vmem:[%s3 + $0x38] sm:$0xff]
        %331 = vset.pattern.permute.xlu0 0
        %332 = vperm.xlu0 %331, %v322
        %v333 = vpop.permute.xlu0 %332
        %336 = vset.pattern.permute.xlu0 0
        %337 = vperm.xlu0 %336, %v323
        %v338 = vpop.permute.xlu0 %337
        %341 = vset.pattern.permute.xlu0 0
        %342 = vperm.xlu0 %341, %v324
        %v343 = vpop.permute.xlu0 %342
        %346 = vset.pattern.permute.xlu0 0
        %347 = vperm.xlu0 %346, %v325
        %v348 = vpop.permute.xlu0 %347
        %351 = vset.pattern.permute.xlu0 0
        %352 = vperm.xlu0 %351, %v326
        %v353 = vpop.permute.xlu0 %352
        %356 = vset.pattern.permute.xlu0 0
        %357 = vperm.xlu0 %356, %v327
        %v358 = vpop.permute.xlu0 %357
        %361 = vset.pattern.permute.xlu0 0
        %362 = vperm.xlu0 %361, %v328
        %v363 = vpop.permute.xlu0 %362
        %366 = vset.pattern.permute.xlu0 0
        %367 = vperm.xlu0 %366, %v329
        %v368 = vpop.permute.xlu0 %367
        %v370 = vperm.slane %v321, 0
        %v371 = vmul.f32 %v333, %v370
        %v372 = vmul.f32 %v338, %v370
        %v373 = vmul.f32 %v343, %v370
        %v374 = vmul.f32 %v348, %v370
        %v375 = vmul.f32 %v353, %v370
        %v376 = vmul.f32 %v358, %v370
        %v377 = vmul.f32 %v363, %v370
        %v378 = vmul.f32 %v368, %v370
        %379 = vset.pattern.permute.xlu0 1
        %380 = vperm.xlu0 %379, %v322
        %v381 = vpop.permute.xlu0 %380
        %383 = vset.pattern.permute.xlu0 1
        %384 = vperm.xlu0 %383, %v323
        %v385 = vpop.permute.xlu0 %384
        %387 = vset.pattern.permute.xlu0 1
        %388 = vperm.xlu0 %387, %v324
        %v389 = vpop.permute.xlu0 %388
        %391 = vset.pattern.permute.xlu0 1
        %392 = vperm.xlu0 %391, %v325
        %v393 = vpop.permute.xlu0 %392
        %395 = vset.pattern.permute.xlu0 1
        %396 = vperm.xlu0 %395, %v326
        %v397 = vpop.permute.xlu0 %396
        %399 = vset.pattern.permute.xlu0 1
        %400 = vperm.xlu0 %399, %v327
        %v401 = vpop.permute.xlu0 %400
        %403 = vset.pattern.permute.xlu0 1
        %404 = vperm.xlu0 %403, %v328
        %v405 = vpop.permute.xlu0 %404
        %407 = vset.pattern.permute.xlu0 1
        %408 = vperm.xlu0 %407, %v329
        %v409 = vpop.permute.xlu0 %408
        %v411 = vperm.slane %v321, 1
        %v412 = vmul.f32 %v381, %v411
        %v413 = vmul.f32 %v385, %v411
        %v414 = vmul.f32 %v389, %v411
        %v415 = vmul.f32 %v393, %v411
        %v416 = vmul.f32 %v397, %v411
        %v417 = vmul.f32 %v401, %v411
        %v418 = vmul.f32 %v405, %v411
        %v419 = vmul.f32 %v409, %v411
        %v420 = vadd.f32 %v371, %v412
        %v421 = vadd.f32 %v372, %v413
        %v422 = vadd.f32 %v373, %v414
        %v423 = vadd.f32 %v374, %v415
        %v424 = vadd.f32 %v375, %v416
        %v425 = vadd.f32 %v376, %v417
        %v426 = vadd.f32 %v377, %v418
        %v427 = vadd.f32 %v378, %v419
        %428 = vset.pattern.permute.xlu0 2
        %429 = vperm.xlu0 %428, %v322
        %v430 = vpop.permute.xlu0 %429
        %432 = vset.pattern.permute.xlu0 2
        %433 = vperm.xlu0 %432, %v323
        %v434 = vpop.permute.xlu0 %433
        %436 = vset.pattern.permute.xlu0 2
        %437 = vperm.xlu0 %436, %v324
        %v438 = vpop.permute.xlu0 %437
        %440 = vset.pattern.permute.xlu0 2
        %441 = vperm.xlu0 %440, %v325
        %v442 = vpop.permute.xlu0 %441
        %444 = vset.pattern.permute.xlu0 2
        %445 = vperm.xlu0 %444, %v326
        %v446 = vpop.permute.xlu0 %445
        %448 = vset.pattern.permute.xlu0 2
        %449 = vperm.xlu0 %448, %v327
        %v450 = vpop.permute.xlu0 %449
        %452 = vset.pattern.permute.xlu0 2
        %453 = vperm.xlu0 %452, %v328
        %v454 = vpop.permute.xlu0 %453
        %456 = vset.pattern.permute.xlu0 2
        %457 = vperm.xlu0 %456, %v329
        %v458 = vpop.permute.xlu0 %457
        %v460 = vperm.slane %v321, 2
        %v461 = vmul.f32 %v430, %v460
        %v462 = vmul.f32 %v434, %v460
        %v463 = vmul.f32 %v438, %v460
        %v464 = vmul.f32 %v442, %v460
        %v465 = vmul.f32 %v446, %v460
        %v466 = vmul.f32 %v450, %v460
        %v467 = vmul.f32 %v454, %v460
        %v468 = vmul.f32 %v458, %v460
        %v469 = vadd.f32 %v420, %v461
        %v470 = vadd.f32 %v421, %v462
        %v471 = vadd.f32 %v422, %v463
        %v472 = vadd.f32 %v423, %v464
        %v473 = vadd.f32 %v424, %v465
        %v474 = vadd.f32 %v425, %v466
        %v475 = vadd.f32 %v426, %v467
        %v476 = vadd.f32 %v427, %v468
        %477 = vset.pattern.permute.xlu0 3
        %478 = vperm.xlu0 %477, %v322
        %v479 = vpop.permute.xlu0 %478
        %481 = vset.pattern.permute.xlu0 3
        %482 = vperm.xlu0 %481, %v323
        %v483 = vpop.permute.xlu0 %482
        %485 = vset.pattern.permute.xlu0 3
        %486 = vperm.xlu0 %485, %v324
        %v487 = vpop.permute.xlu0 %486
        %489 = vset.pattern.permute.xlu0 3
        %490 = vperm.xlu0 %489, %v325
        %v491 = vpop.permute.xlu0 %490
        %493 = vset.pattern.permute.xlu0 3
        %494 = vperm.xlu0 %493, %v326
        %v495 = vpop.permute.xlu0 %494
        %497 = vset.pattern.permute.xlu0 3
        %498 = vperm.xlu0 %497, %v327
        %v499 = vpop.permute.xlu0 %498
        %501 = vset.pattern.permute.xlu0 3
        %502 = vperm.xlu0 %501, %v328
        %v503 = vpop.permute.xlu0 %502
        %505 = vset.pattern.permute.xlu0 3
        %506 = vperm.xlu0 %505, %v329
        %v507 = vpop.permute.xlu0 %506
        %v509 = vperm.slane %v321, 3
        %v510 = vmul.f32 %v479, %v509
        %v511 = vmul.f32 %v483, %v509
        %v512 = vmul.f32 %v487, %v509
        %v513 = vmul.f32 %v491, %v509
        %v514 = vmul.f32 %v495, %v509
        %v515 = vmul.f32 %v499, %v509
        %v516 = vmul.f32 %v503, %v509
        %v517 = vmul.f32 %v507, %v509
        %v518 = vadd.f32 %v469, %v510
        %v519 = vadd.f32 %v470, %v511
        %v520 = vadd.f32 %v471, %v512
        %v521 = vadd.f32 %v472, %v513
        %v522 = vadd.f32 %v473, %v514
        %v523 = vadd.f32 %v474, %v515
        %v524 = vadd.f32 %v475, %v516
        %v525 = vadd.f32 %v476, %v517
        %v526 = vpack.c.bf16 %v518, %v518
        %v527 = vpack.c.bf16 %v519, %v519
        %v528 = vpack.c.bf16 %v520, %v520
        %v529 = vpack.c.bf16 %v521, %v521
        %v530 = vpack.c.bf16 %v522, %v522
        %v531 = vpack.c.bf16 %v523, %v523
        %v532 = vpack.c.bf16 %v524, %v524
        %v533 = vpack.c.bf16 %v525, %v525
        %534 = vst [vmem:[%s279] sm:$0xf] %v526
        %535 = vst [vmem:[%s279 + $0x4] sm:$0xf] %v527
        %536 = vst [vmem:[%s279 + $0x8] sm:$0xf] %v528
        %537 = vst [vmem:[%s279 + $0xc] sm:$0xf] %v529
        %538 = vst [vmem:[%s279 + $0x10] sm:$0xf] %v530
        %539 = vst [vmem:[%s279 + $0x14] sm:$0xf] %v531
        %540 = vst [vmem:[%s279 + $0x18] sm:$0xf] %v532
        %541 = vst [vmem:[%s279 + $0x1c] sm:$0xf] %v533
        %p542 = scmp.eq.s32.totalorder %s23, 0
        // Predicated region
        $region41: #{spatial_pyramid_pooling.2} parent=39 // pred_check
          %p543 = pneg %p542
        $region42: #{spatial_pyramid_pooling.2} parent=39 // pred_check_branch
          %545 = sbr.rel (%p543) target = $region44
        $region43: #{spatial_pyramid_pooling.2} parent=39 // pred_region
          %vm546 = vcmask 523264
          %547 = vst.msk [vmem:[%s305] sm:$0xff] %vm546, 0.0
          %548 = vst.msk [vmem:[%s305 + $0x8] sm:$0xff] %vm546, 0.0
          %549 = vst.msk [vmem:[%s305 + $0x10] sm:$0xff] %vm546, 0.0
          %550 = vst.msk [vmem:[%s305 + $0x18] sm:$0xff] %vm546, 0.0
          %551 = vst.msk [vmem:[%s305 + $0x20] sm:$0xff] %vm546, 0.0
          %552 = vst.msk [vmem:[%s305 + $0x28] sm:$0xff] %vm546, 0.0
          %553 = vst.msk [vmem:[%s305 + $0x30] sm:$0xff] %vm546, 0.0
          %554 = vst.msk [vmem:[%s305 + $0x38] sm:$0xff] %vm546, 0.0
        $region44: #{spatial_pyramid_pooling.2} parent=39 // pred_fallthru
          _
        %v555 = vld [vmem:[%s305] sm:$0xff]
        %v556 = vld [vmem:[%s305 + $0x8] sm:$0xff]
        %v557 = vld [vmem:[%s305 + $0x10] sm:$0xff]
        %v558 = vld [vmem:[%s305 + $0x18] sm:$0xff]
        %v559 = vld [vmem:[%s305 + $0x20] sm:$0xff]
        %v560 = vld [vmem:[%s305 + $0x28] sm:$0xff]
        %v561 = vld [vmem:[%s305 + $0x30] sm:$0xff]
        %v562 = vld [vmem:[%s305 + $0x38] sm:$0xff]
        %v563 = vld [vmem:[%s299] sm:$0xf]
        %v564 = vld [vmem:[%s299 + $0x4] sm:$0xf]
        %v565 = vld [vmem:[%s299 + $0x8] sm:$0xf]
        %v566 = vld [vmem:[%s299 + $0xc] sm:$0xf]
        %v567 = vld [vmem:[%s299 + $0x10] sm:$0xf]
        %v568 = vld [vmem:[%s299 + $0x14] sm:$0xf]
        %v569 = vld [vmem:[%s299 + $0x18] sm:$0xf]
        %v570 = vld [vmem:[%s299 + $0x1c] sm:$0xf]
        %v571 = vld [vmem:[%s299 + $0x20] sm:$0xf]
        %v572 = vld [vmem:[%s299 + $0x24] sm:$0xf]
        %v573 = vld [vmem:[%s299 + $0x28] sm:$0xf]
        %v574 = vld [vmem:[%s299 + $0x2c] sm:$0xf]
        %v575 = vld [vmem:[%s299 + $0x30] sm:$0xf]
        %v576 = vld [vmem:[%s299 + $0x34] sm:$0xf]
        %v577 = vld [vmem:[%s299 + $0x38] sm:$0xf]
        %v578 = vld [vmem:[%s299 + $0x3c] sm:$0xf]
        %v587 = vunpack.c.l.b16 %v526
        %v588 = vunpack.c.l.b16 %v527
        %v589 = vunpack.c.l.b16 %v528
        %v590 = vunpack.c.l.b16 %v529
        %v591 = vunpack.c.l.b16 %v530
        %v592 = vunpack.c.l.b16 %v531
        %v593 = vunpack.c.l.b16 %v532
        %v594 = vunpack.c.l.b16 %v533
        %v595 = vpack.c.b16 %v588, %v587
        %v596 = vpack.c.b16 %v590, %v589
        %v597 = vpack.c.b16 %v592, %v591
        %v598 = vpack.c.b16 %v594, %v593
        %v619 = vunpack.c.l.b16 %v563
        %v620 = vunpack.c.l.b16 %v564
        %v621 = vunpack.c.l.b16 %v565
        %v622 = vunpack.c.l.b16 %v566
        %v623 = vunpack.c.l.b16 %v567
        %v624 = vunpack.c.l.b16 %v568
        %v625 = vunpack.c.l.b16 %v569
        %v626 = vunpack.c.l.b16 %v570
        %v627 = vunpack.c.l.b16 %v571
        %v628 = vunpack.c.l.b16 %v572
        %v629 = vunpack.c.l.b16 %v573
        %v630 = vunpack.c.l.b16 %v574
        %v631 = vunpack.c.l.b16 %v575
        %v632 = vunpack.c.l.b16 %v576
        %v633 = vunpack.c.l.b16 %v577
        %v634 = vunpack.c.l.b16 %v578
        %v635 = vpack.c.b16 %v620, %v619
        %v636 = vpack.c.b16 %v622, %v621
        %v637 = vpack.c.b16 %v624, %v623
        %v638 = vpack.c.b16 %v626, %v625
        %v639 = vpack.c.b16 %v628, %v627
        %v640 = vpack.c.b16 %v630, %v629
        %v641 = vpack.c.b16 %v632, %v631
        %v642 = vpack.c.b16 %v634, %v633
        %651 = vmatpush.bf16.msra.mxu0 %v642
        %652 = vmatpush.bf16.msra.mxu0 %v641
        %653 = vmatpush.bf16.msra.mxu0 %v640
        %654 = vmatpush.bf16.msra.mxu0 %v639
        %655 = vmatpush.bf16.msra.mxu0 %v638
        %656 = vmatpush.bf16.msra.mxu0 %v637
        %657 = vmatpush.bf16.msra.mxu0 %v636
        %658 = vmatpush.bf16.msra.mxu0 %v635
        %659 = vmatmul.bf16.gmra.mxu0 %v595
        %v660 = vpop.f32.mrf.mxu0
        %v661 = vadd.f32 0.0, %v660
        %v662 = vpop.f32.mrf.mxu0
        %v663 = vadd.f32 0.0, %v662
        %664 = vmatmul.bf16.gmra.mxu0 %v596
        %v665 = vpop.f32.mrf.mxu0
        %v666 = vadd.f32 0.0, %v665
        %v667 = vpop.f32.mrf.mxu0
        %v668 = vadd.f32 0.0, %v667
        %669 = vmatmul.bf16.gmra.mxu0 %v597
        %v670 = vpop.f32.mrf.mxu0
        %v671 = vadd.f32 0.0, %v670
        %v672 = vpop.f32.mrf.mxu0
        %v673 = vadd.f32 0.0, %v672
        %674 = vmatmul.bf16.gmra.mxu0 %v598
        %v675 = vpop.f32.mrf.mxu0
        %v676 = vadd.f32 0.0, %v675
        %v677 = vpop.f32.mrf.mxu0
        %v678 = vadd.f32 0.0, %v677
        %679 = vdwg.mxu0
        %v680 = vadd.f32 %v555, %v661
        %v681 = vadd.f32 %v556, %v663
        %v682 = vadd.f32 %v557, %v666
        %v683 = vadd.f32 %v558, %v668
        %v684 = vadd.f32 %v559, %v671
        %v685 = vadd.f32 %v560, %v673
        %v686 = vadd.f32 %v561, %v676
        %v687 = vadd.f32 %v562, %v678
        %vm688 = vcmask 523264
        %689 = vst.msk [vmem:[%s305] sm:$0xff] %vm688, %v680
        %690 = vst.msk [vmem:[%s305 + $0x8] sm:$0xff] %vm688, %v681
        %691 = vst.msk [vmem:[%s305 + $0x10] sm:$0xff] %vm688, %v682
        %692 = vst.msk [vmem:[%s305 + $0x18] sm:$0xff] %vm688, %v683
        %693 = vst.msk [vmem:[%s305 + $0x20] sm:$0xff] %vm688, %v684
        %694 = vst.msk [vmem:[%s305 + $0x28] sm:$0xff] %vm688, %v685
        %695 = vst.msk [vmem:[%s305 + $0x30] sm:$0xff] %vm688, %v686
        %696 = vst.msk [vmem:[%s305 + $0x38] sm:$0xff] %vm688, %v687
        %s697 = sand.u32 %s157, 1
        %s698 = sand.u32 %s157, 1
        %s699 = smul.addr %s698, 32
        %s700 = scalar_lea.vmem [#allocation2], %s699
        %p701 = scmp.lt.s32.totalorder %s22, 1
        %s702 = scalar_select %p701, %s22, 1
        %s703 = smul.addr %s702, 8
        %s704 = smul.addr %s703, 8
        %s705 = scalar_lea.vmem %s6, %s704
        // Predicated region
        $region45: #{spatial_pyramid_pooling.2} parent=39 // pred_check
          %p706 = pneg %p167
        $region46: #{spatial_pyramid_pooling.2} parent=39 // pred_check_branch
          %708 = sbr.rel (%p706) target = $region48
        $region47: #{spatial_pyramid_pooling.2} parent=39 // pred_region
          %s709 = smul.addr %s22, 16
          %s710 = sadd.s32 %s23, %s709
          %s711 = smul.addr %s710, 4
          %s712 = scalar_lea.vmem %s5, %s711
          // Predicated region
          $region49: #{spatial_pyramid_pooling.2} parent=47 // pred_check
            _
          $region50: #{spatial_pyramid_pooling.2} parent=47 // pred_check_branch
            %714 = sbr.rel (0) target = $region52
          $region51: #{spatial_pyramid_pooling.2} parent=47 // pred_region
            // Predicated region
            $region53: #{spatial_pyramid_pooling.2} parent=51 // pred_check
              _
            $region54: #{spatial_pyramid_pooling.2} parent=51 // pred_check_branch
              %716 = sbr.rel target = $region56
            $region55: #{spatial_pyramid_pooling.2} parent=51 // pred_region
              // Predicated region
              $region68: #{spatial_pyramid_pooling.2} parent=55 // pred_check
                _
              $region69: #{spatial_pyramid_pooling.2} parent=55 // pred_check_branch
                %746 = sbr.rel (0) target = $region71
              $region70: #{spatial_pyramid_pooling.2} parent=55 // pred_region
                loop: start=0, step=1, limit=1
                $region72: #{spatial_pyramid_pooling.2} parent=70 // loop_pre_header
                  _
                $region73: #{spatial_pyramid_pooling.2} parent=70 // loop_header
                  %s748 = sphi 0, %s752
                  %p749 = scmp.ge.s32.totalorder %s748, 1
                  %s753 = sphi %s700, %s700
                  %s754 = sphi %s712, %s712
                $region74: #{spatial_pyramid_pooling.2} parent=70 // loop_header_branch
                  %751 = sbr.rel (%p749) target = $region78
                $region75: #{spatial_pyramid_pooling.2} parent=70 // loop_body
                  _
                $region76: #{spatial_pyramid_pooling.2} parent=70 // loop_footer
                  %s752 = sadd.s32 1, %s748
                $region77: #{spatial_pyramid_pooling.2} parent=70 // loop_footer_branch
                  %747 = sbr.rel target = $region73
                $region78: #{spatial_pyramid_pooling.2} parent=70 // loop_exit
                  _
                %s756 = ssub.s32 16, 1
                loop: start=0, step=1, limit=1
                $region79: #{spatial_pyramid_pooling.2} parent=70 // loop_pre_header
                  _
                $region80: #{spatial_pyramid_pooling.2} parent=70 // loop_header
                  %s758 = sphi 0, %s762
                  %p759 = scmp.ge.s32.totalorder %s758, 1
                  %s763 = sphi %s700, %s700
                  %s764 = sphi %s712, %s712
                $region81: #{spatial_pyramid_pooling.2} parent=70 // loop_header_branch
                  %761 = sbr.rel (%p759) target = $region85
                $region82: #{spatial_pyramid_pooling.2} parent=70 // loop_body
                  %v765 = vld [vmem:[%s763] sm:%s756]
                  %766 = vst [vmem:[%s764] sm:%s756] %v765
                  %v767 = vld [vmem:[%s763 + $0x4] sm:%s756]
                  %768 = vst [vmem:[%s764 + $0x8] sm:%s756] %v767
                  %v769 = vld [vmem:[%s763 + $0x8] sm:%s756]
                  %770 = vst [vmem:[%s764 + $0x10] sm:%s756] %v769
                  %v771 = vld [vmem:[%s763 + $0xc] sm:%s756]
                  %772 = vst [vmem:[%s764 + $0x18] sm:%s756] %v771
                  %v773 = vld [vmem:[%s763 + $0x10] sm:%s756]
                  %774 = vst [vmem:[%s764 + $0x20] sm:%s756] %v773
                  %v775 = vld [vmem:[%s763 + $0x14] sm:%s756]
                  %776 = vst [vmem:[%s764 + $0x28] sm:%s756] %v775
                  %v777 = vld [vmem:[%s763 + $0x18] sm:%s756]
                  %778 = vst [vmem:[%s764 + $0x30] sm:%s756] %v777
                  %v779 = vld [vmem:[%s763 + $0x1c] sm:%s756]
                  %780 = vst [vmem:[%s764 + $0x38] sm:%s756] %v779
                $region83: #{spatial_pyramid_pooling.2} parent=70 // loop_footer
                  %s762 = sadd.s32 1, %s758
                $region84: #{spatial_pyramid_pooling.2} parent=70 // loop_footer_branch
                  %757 = sbr.rel target = $region80
                $region85: #{spatial_pyramid_pooling.2} parent=70 // loop_exit
                  _
              $region71: #{spatial_pyramid_pooling.2} parent=55 // pred_fallthru
                _
            $region56: #{spatial_pyramid_pooling.2} parent=51 // pred_fallthru
              _
            // Predicated region
            $region57: #{spatial_pyramid_pooling.2} parent=51 // pred_check
              _
            $region58: #{spatial_pyramid_pooling.2} parent=51 // pred_check_branch
              %718 = sbr.rel (0) target = $region60
            $region59: #{spatial_pyramid_pooling.2} parent=51 // pred_region
              %s720 = ssub.s32 16, 1
              loop: start=0, step=1, limit=1
              $region61: #{spatial_pyramid_pooling.2} parent=59 // loop_pre_header
                _
              $region62: #{spatial_pyramid_pooling.2} parent=59 // loop_header
                %s722 = sphi 0, %s726
                %p723 = scmp.ge.s32.totalorder %s722, 1
                %s727 = sphi %s700, %s700
                %s728 = sphi %s712, %s712
              $region63: #{spatial_pyramid_pooling.2} parent=59 // loop_header_branch
                %725 = sbr.rel (%p723) target = $region67
              $region64: #{spatial_pyramid_pooling.2} parent=59 // loop_body
                %v729 = vld [vmem:[%s727] sm:%s720]
                %730 = vst [vmem:[%s728] sm:%s720] %v729
                %v731 = vld [vmem:[%s727 + $0x4] sm:%s720]
                %732 = vst [vmem:[%s728 + $0x8] sm:%s720] %v731
                %v733 = vld [vmem:[%s727 + $0x8] sm:%s720]
                %734 = vst [vmem:[%s728 + $0x10] sm:%s720] %v733
                %v735 = vld [vmem:[%s727 + $0xc] sm:%s720]
                %736 = vst [vmem:[%s728 + $0x18] sm:%s720] %v735
                %v737 = vld [vmem:[%s727 + $0x10] sm:%s720]
                %738 = vst [vmem:[%s728 + $0x20] sm:%s720] %v737
                %v739 = vld [vmem:[%s727 + $0x14] sm:%s720]
                %740 = vst [vmem:[%s728 + $0x28] sm:%s720] %v739
                %v741 = vld [vmem:[%s727 + $0x18] sm:%s720]
                %742 = vst [vmem:[%s728 + $0x30] sm:%s720] %v741
                %v743 = vld [vmem:[%s727 + $0x1c] sm:%s720]
                %744 = vst [vmem:[%s728 + $0x38] sm:%s720] %v743
              $region65: #{spatial_pyramid_pooling.2} parent=59 // loop_footer
                %s726 = sadd.s32 1, %s722
              $region66: #{spatial_pyramid_pooling.2} parent=59 // loop_footer_branch
                %721 = sbr.rel target = $region62
              $region67: #{spatial_pyramid_pooling.2} parent=59 // loop_exit
                _
            $region60: #{spatial_pyramid_pooling.2} parent=51 // pred_fallthru
              _
          $region52: #{spatial_pyramid_pooling.2} parent=47 // pred_fallthru
            _
          %781 = vnop
        $region48: #{spatial_pyramid_pooling.2} parent=39 // pred_fallthru
          _
        // Predicated region
        $region86: #{spatial_pyramid_pooling.2} parent=39 // pred_check
          %p782 = pneg %p193
        $region87: #{spatial_pyramid_pooling.2} parent=39 // pred_check_branch
          %784 = sbr.rel (%p782) target = $region89
        $region88: #{spatial_pyramid_pooling.2} parent=39 // pred_region
          _
        $region89: #{spatial_pyramid_pooling.2} parent=39 // pred_fallthru
          _
      $region40: #{spatial_pyramid_pooling.2} parent=5 // pred_fallthru
        _
      %p785 = scmp.le.s32.totalorder 2, %s13
      // Predicated region
      $region90: #{spatial_pyramid_pooling.2} parent=5 // pred_check
        %p786 = pneg %p785
      $region91: #{spatial_pyramid_pooling.2} parent=5 // pred_check_branch
        %788 = sbr.rel (%p786) target = $region93
      $region92: #{spatial_pyramid_pooling.2} parent=5 // pred_region
        %s789 = ssub.s32 %s13, 2
        // Predicated region
        $region94: #{spatial_pyramid_pooling.2} parent=92 // pred_check
          %p790 = pneg %p173
        $region95: #{spatial_pyramid_pooling.2} parent=92 // pred_check_branch
          %792 = sbr.rel (%p790) target = $region97
        $region96: #{spatial_pyramid_pooling.2} parent=92 // pred_region
          %s793 = sand.u32 %s158, 1
          %s794 = sand.u32 %s158, 1
          %s795 = smul.addr %s794, 32
          %s796 = scalar_lea.vmem [#allocation2], %s795
        $region97: #{spatial_pyramid_pooling.2} parent=92 // pred_fallthru
          _
        // Predicated region
        $region98: #{spatial_pyramid_pooling.2} parent=92 // pred_check
          %p797 = pneg %p199
        $region99: #{spatial_pyramid_pooling.2} parent=92 // pred_check_branch
          %799 = sbr.rel (%p797) target = $region101
        $region100: #{spatial_pyramid_pooling.2} parent=92 // pred_region
          %p800 = scmp.lt.s32.totalorder %s24, 1
          %s801 = scalar_select %p800, %s24, 1
          %s802 = smul.addr %s801, 8
          %s803 = smul.addr %s802, 8
          %s804 = scalar_lea.vmem %s6, %s803
        $region101: #{spatial_pyramid_pooling.2} parent=92 // pred_fallthru
          _
      $region93: #{spatial_pyramid_pooling.2} parent=5 // pred_fallthru
        _
    $region6: #{spatial_pyramid_pooling.2} parent=1 // loop_footer
      %s17 = sadd.s32 1, %s13
    $region7: #{spatial_pyramid_pooling.2} parent=1 // loop_footer_branch
      %12 = sbr.rel target = $region3
    $region8: #{spatial_pyramid_pooling.2} parent=1 // loop_exit
      _

// kernel: spatial_pyramid_pooling.3
$region0: #{spatial_pyramid_pooling.3}
  #allocation0 [shape = 'u32[]', space=smem, size = 0x4, offset = 0x4, fixed_abs, tag = 'smem constant byte address 0x4 - core index']
  #allocation1 [shape = 'u32[72,128]{1,0:T(1,128)}', space=vmem, size = 0x9000, scoped, tag = 'internal scratch']
  #allocation2 [shape = 'bf16[128,64]{1,0:T(8,128)(2,1)}', space=vmem, size = 0x8000, scoped, tag = 'scratch operand']
  %s0 = inlined_call_operand.vmem [shape: bf16[2,64,256], index: 0, kind: input, shape index: {}]
  %s1 = inlined_call_operand.vmem [shape: f32[2,64,64], index: 1, kind: input, shape index: {}]
  %s2 = inlined_call_operand.vmem [shape: bf16[64,256], index: 2, kind: input, shape index: {}]
  %s3 = inlined_call_operand.vmem [shape: f32[64,1], index: 3, kind: input, shape index: {}]
  %s4 = inlined_call_operand.vmem [shape: f32[64,1], index: 4, kind: input, shape index: {}]
  %s5 = inlined_call_operand.vmem [shape: f32[64,64], index: 5, kind: input, shape index: {}]
  %s6 = inlined_call_operand.vmem [shape: f32[64,64], index: 6, kind: input, shape index: {}]
  %s7 = inlined_call_operand.vmem [shape: bf16[128,64], index: 7, kind: input, shape index: {}]
  %s8 = inlined_call_operand.vmem [shape: f32[128,64], index: 8, kind: input, shape index: {}]
  %s9 = inlined_call_operand.vmem [shape: f32[128,1], index: 9, kind: input, shape index: {}]
  %s10 = inlined_call_operand.vmem [shape: bf16[32,192], index: 10, kind: input, shape index: {}]
  %s11 = inlined_call_operand.vmem [shape: f32[2,32,256], index: 11, kind: output, shape index: {}]
  %s12 = sld [smem:[#allocation0]]
  $region197: #{spatial_pyramid_pooling.3} parent=0
    _
  %s14 = ssub.s32 1, %s12
  %s15 = scalar_select 0, %s14, %s12
  $region1: #{spatial_pyramid_pooling.3} parent=0
    #allocation3 [shape = 'u8[32768]{0}', space=vmem, size = 0x8000, scoped, tag = 'input window, operand 0']
    #allocation4 [shape = 'u8[32768]{0}', space=vmem, size = 0x8000, scoped, tag = 'input window, operand 2']
    #allocation5 [shape = 'u8[32768]{0}', space=vmem, size = 0x8000, scoped, tag = 'output window, operand 0']
    loop: start=0, step=1, limit=6
    $region2: #{spatial_pyramid_pooling.3} parent=1 // loop_pre_header
      _
    $region3: #{spatial_pyramid_pooling.3} parent=1 // loop_header
      %s17 = sphi 0, %s21
      %p18 = scmp.ge.s32.totalorder %s17, 6
      %s24 = sphi 0, %s36
      %s25 = sphi 0, %s32
      %s26 = sphi 0, %s24
      %s27 = sphi 0, %s25
      %s28 = sphi 0, %s26
      %s29 = sphi 0, %s27
      %s41 = sphi 0, %s43
      %s44 = sphi 0, %s41
      %s45 = sphi 0, %s44
      %s61 = sphi 0, %s45
      %s67 = sphi 0, %s69
      %s70 = sphi 0, %s67
      %s71 = sphi 0, %s70
      %s87 = sphi 0, %s71
      %s93 = sphi 0, %s95
      %s96 = sphi 0, %s93
      %s97 = sphi 0, %s96
      %s113 = sphi 0, %s97
      %s117 = sphi 0, %s117
      %s119 = sphi 0, %s117
      %s120 = sphi 0, %s119
      %s134 = sphi 0, %s120
      %s138 = sphi 0, %s138
      %s140 = sphi 0, %s138
      %s141 = sphi 0, %s140
      %s155 = sphi 0, %s141
      %s159 = sphi 0, %s159
      %s161 = sphi 0, %s159
      %s162 = sphi 0, %s161
      %s176 = sphi 0, %s162
      %s180 = sphi 0, %s180
      %s182 = sphi 0, %s180
      %s183 = sphi 0, %s182
      %s197 = sphi 0, %s183
      %s201 = sphi 0, %s201
      %s203 = sphi 0, %s201
      %s204 = sphi 0, %s203
      %s218 = sphi 0, %s204
      %s222 = sphi 0, %s222
      %s224 = sphi 0, %s222
      %s225 = sphi 0, %s224
      %s239 = sphi 0, %s225
      %s243 = sphi 0, %s243
      %s245 = sphi 0, %s243
      %s246 = sphi 0, %s245
      %s260 = sphi 0, %s246
      %s264 = sphi 0, %s264
      %s266 = sphi 0, %s264
      %s267 = sphi 0, %s266
      %s281 = sphi 0, %s267
      %s289 = sphi 0, %s291
      %s292 = sphi 0, %s289
      %s293 = sphi 0, %s292
      %s309 = sphi 0, %s293
    $region4: #{spatial_pyramid_pooling.3} parent=1 // loop_header_branch
      %20 = sbr.rel (%p18) target = $region8
    $region5: #{spatial_pyramid_pooling.3} parent=1 // loop_body
      %s22 = ssub.s32 %s17, 1
      %s23 = ssub.s32 %s17, 2
      %s30 = sadd.s32 1, %s25
      %p31 = scmp.ge.s32.totalorder %s30, 2
      %s32 = scalar_select %p31, 0, %s30
      %s33 = sadd.s32 1, %s24
      %s34 = scalar_select %p31, %s33, %s24
      %p35 = scmp.ge.s32.totalorder %s34, 2
      %s36 = scalar_select %p35, 0, %s34
      %s37 = ssub.s32 %s24, %s36
      %s38 = ssub.s32 %s25, %s32
      %s39 = sor.u32 %s37, %s38
      %p40 = scmp.eq.s32.totalorder %s39, 0
      %s42 = sadd.s32 %s41, 1
      %s43 = scalar_select %p40, %s41, %s42
      %p46 = pneg %p40
      %p47 = scmp.eq.s32.totalorder %s17, 3
      %p48 = por %p46, %p47
      %p49 = scmp.ne.s32.totalorder %s41, %s44
      %p50 = scmp.eq.s32.totalorder %s17, 0
      %p51 = por %p49, %p50
      %p52 = scmp.ne.s32.totalorder %s41, %s44
      %p53 = scmp.eq.s32.totalorder %s22, 3
      %p54 = por %p52, %p53
      %p55 = scmp.ne.s32.totalorder %s44, %s45
      %p56 = scmp.eq.s32.totalorder %s22, 0
      %p57 = por %p55, %p56
      %p58 = scmp.ne.s32.totalorder %s44, %s45
      %p59 = scmp.eq.s32.totalorder %s23, 3
      %p60 = por %p58, %p59
      %p62 = scmp.ne.s32.totalorder %s45, %s61
      %p63 = scmp.eq.s32.totalorder %s23, 0
      %p64 = por %p62, %p63
      %s65 = ssub.s32 %s24, %s36
      %p66 = scmp.eq.s32.totalorder %s65, 0
      %s68 = sadd.s32 %s67, 1
      %s69 = scalar_select %p66, %s67, %s68
      %p72 = pneg %p66
      %p73 = scmp.eq.s32.totalorder %s17, 3
      %p74 = por %p72, %p73
      %p75 = scmp.ne.s32.totalorder %s67, %s70
      %p76 = scmp.eq.s32.totalorder %s17, 0
      %p77 = por %p75, %p76
      %p78 = scmp.ne.s32.totalorder %s67, %s70
      %p79 = scmp.eq.s32.totalorder %s22, 3
      %p80 = por %p78, %p79
      %p81 = scmp.ne.s32.totalorder %s70, %s71
      %p82 = scmp.eq.s32.totalorder %s22, 0
      %p83 = por %p81, %p82
      %p84 = scmp.ne.s32.totalorder %s70, %s71
      %p85 = scmp.eq.s32.totalorder %s23, 3
      %p86 = por %p84, %p85
      %p88 = scmp.ne.s32.totalorder %s71, %s87
      %p89 = scmp.eq.s32.totalorder %s23, 0
      %p90 = por %p88, %p89
      %s91 = ssub.s32 %s25, %s32
      %p92 = scmp.eq.s32.totalorder %s91, 0
      %s94 = sadd.s32 %s93, 1
      %s95 = scalar_select %p92, %s93, %s94
      %p98 = pneg %p92
      %p99 = scmp.eq.s32.totalorder %s17, 3
      %p100 = por %p98, %p99
      %p101 = scmp.ne.s32.totalorder %s93, %s96
      %p102 = scmp.eq.s32.totalorder %s17, 0
      %p103 = por %p101, %p102
      %p104 = scmp.ne.s32.totalorder %s93, %s96
      %p105 = scmp.eq.s32.totalorder %s22, 3
      %p106 = por %p104, %p105
      %p107 = scmp.ne.s32.totalorder %s96, %s97
      %p108 = scmp.eq.s32.totalorder %s22, 0
      %p109 = por %p107, %p108
      %p110 = scmp.ne.s32.totalorder %s96, %s97
      %p111 = scmp.eq.s32.totalorder %s23, 3
      %p112 = por %p110, %p111
      %p114 = scmp.ne.s32.totalorder %s97, %s113
      %p115 = scmp.eq.s32.totalorder %s23, 0
      %p116 = por %p114, %p115
      %s118 = sadd.s32 %s117, 1
      %p121 = scmp.eq.s32.totalorder %s17, 3
      %p122 = scmp.ne.s32.totalorder %s117, %s119
      %p123 = scmp.eq.s32.totalorder %s17, 0
      %p124 = por %p122, %p123
      %p125 = scmp.ne.s32.totalorder %s117, %s119
      %p126 = scmp.eq.s32.totalorder %s22, 3
      %p127 = por %p125, %p126
      %p128 = scmp.ne.s32.totalorder %s119, %s120
      %p129 = scmp.eq.s32.totalorder %s22, 0
      %p130 = por %p128, %p129
      %p131 = scmp.ne.s32.totalorder %s119, %s120
      %p132 = scmp.eq.s32.totalorder %s23, 3
      %p133 = por %p131, %p132
      %p135 = scmp.ne.s32.totalorder %s120, %s134
      %p136 = scmp.eq.s32.totalorder %s23, 0
      %p137 = por %p135, %p136
      %s139 = sadd.s32 %s138, 1
      %p142 = scmp.eq.s32.totalorder %s17, 3
      %p143 = scmp.ne.s32.totalorder %s138, %s140
      %p144 = scmp.eq.s32.totalorder %s17, 0
      %p145 = por %p143, %p144
      %p146 = scmp.ne.s32.totalorder %s138, %s140
      %p147 = scmp.eq.s32.totalorder %s22, 3
      %p148 = por %p146, %p147
      %p149 = scmp.ne.s32.totalorder %s140, %s141
      %p150 = scmp.eq.s32.totalorder %s22, 0
      %p151 = por %p149, %p150
      %p152 = scmp.ne.s32.totalorder %s140, %s141
      %p153 = scmp.eq.s32.totalorder %s23, 3
      %p154 = por %p152, %p153
      %p156 = scmp.ne.s32.totalorder %s141, %s155
      %p157 = scmp.eq.s32.totalorder %s23, 0
      %p158 = por %p156, %p157
      %s160 = sadd.s32 %s159, 1
      %p163 = scmp.eq.s32.totalorder %s17, 3
      %p164 = scmp.ne.s32.totalorder %s159, %s161
      %p165 = scmp.eq.s32.totalorder %s17, 0
      %p166 = por %p164, %p165
      %p167 = scmp.ne.s32.totalorder %s159, %s161
      %p168 = scmp.eq.s32.totalorder %s22, 3
      %p169 = por %p167, %p168
      %p170 = scmp.ne.s32.totalorder %s161, %s162
      %p171 = scmp.eq.s32.totalorder %s22, 0
      %p172 = por %p170, %p171
      %p173 = scmp.ne.s32.totalorder %s161, %s162
      %p174 = scmp.eq.s32.totalorder %s23, 3
      %p175 = por %p173, %p174
      %p177 = scmp.ne.s32.totalorder %s162, %s176
      %p178 = scmp.eq.s32.totalorder %s23, 0
      %p179 = por %p177, %p178
      %s181 = sadd.s32 %s180, 1
      %p184 = scmp.eq.s32.totalorder %s17, 3
      %p185 = scmp.ne.s32.totalorder %s180, %s182
      %p186 = scmp.eq.s32.totalorder %s17, 0
      %p187 = por %p185, %p186
      %p188 = scmp.ne.s32.totalorder %s180, %s182
      %p189 = scmp.eq.s32.totalorder %s22, 3
      %p190 = por %p188, %p189
      %p191 = scmp.ne.s32.totalorder %s182, %s183
      %p192 = scmp.eq.s32.totalorder %s22, 0
      %p193 = por %p191, %p192
      %p194 = scmp.ne.s32.totalorder %s182, %s183
      %p195 = scmp.eq.s32.totalorder %s23, 3
      %p196 = por %p194, %p195
      %p198 = scmp.ne.s32.totalorder %s183, %s197
      %p199 = scmp.eq.s32.totalorder %s23, 0
      %p200 = por %p198, %p199
      %s202 = sadd.s32 %s201, 1
      %p205 = scmp.eq.s32.totalorder %s17, 3
      %p206 = scmp.ne.s32.totalorder %s201, %s203
      %p207 = scmp.eq.s32.totalorder %s17, 0
      %p208 = por %p206, %p207
      %p209 = scmp.ne.s32.totalorder %s201, %s203
      %p210 = scmp.eq.s32.totalorder %s22, 3
      %p211 = por %p209, %p210
      %p212 = scmp.ne.s32.totalorder %s203, %s204
      %p213 = scmp.eq.s32.totalorder %s22, 0
      %p214 = por %p212, %p213
      %p215 = scmp.ne.s32.totalorder %s203, %s204
      %p216 = scmp.eq.s32.totalorder %s23, 3
      %p217 = por %p215, %p216
      %p219 = scmp.ne.s32.totalorder %s204, %s218
      %p220 = scmp.eq.s32.totalorder %s23, 0
      %p221 = por %p219, %p220
      %s223 = sadd.s32 %s222, 1
      %p226 = scmp.eq.s32.totalorder %s17, 3
      %p227 = scmp.ne.s32.totalorder %s222, %s224
      %p228 = scmp.eq.s32.totalorder %s17, 0
      %p229 = por %p227, %p228
      %p230 = scmp.ne.s32.totalorder %s222, %s224
      %p231 = scmp.eq.s32.totalorder %s22, 3
      %p232 = por %p230, %p231
      %p233 = scmp.ne.s32.totalorder %s224, %s225
      %p234 = scmp.eq.s32.totalorder %s22, 0
      %p235 = por %p233, %p234
      %p236 = scmp.ne.s32.totalorder %s224, %s225
      %p237 = scmp.eq.s32.totalorder %s23, 3
      %p238 = por %p236, %p237
      %p240 = scmp.ne.s32.totalorder %s225, %s239
      %p241 = scmp.eq.s32.totalorder %s23, 0
      %p242 = por %p240, %p241
      %s244 = sadd.s32 %s243, 1
      %p247 = scmp.eq.s32.totalorder %s17, 3
      %p248 = scmp.ne.s32.totalorder %s243, %s245
      %p249 = scmp.eq.s32.totalorder %s17, 0
      %p250 = por %p248, %p249
      %p251 = scmp.ne.s32.totalorder %s243, %s245
      %p252 = scmp.eq.s32.totalorder %s22, 3
      %p253 = por %p251, %p252
      %p254 = scmp.ne.s32.totalorder %s245, %s246
      %p255 = scmp.eq.s32.totalorder %s22, 0
      %p256 = por %p254, %p255
      %p257 = scmp.ne.s32.totalorder %s245, %s246
      %p258 = scmp.eq.s32.totalorder %s23, 3
      %p259 = por %p257, %p258
      %p261 = scmp.ne.s32.totalorder %s246, %s260
      %p262 = scmp.eq.s32.totalorder %s23, 0
      %p263 = por %p261, %p262
      %s265 = sadd.s32 %s264, 1
      %p268 = scmp.eq.s32.totalorder %s17, 3
      %p269 = scmp.ne.s32.totalorder %s264, %s266
      %p270 = scmp.eq.s32.totalorder %s17, 0
      %p271 = por %p269, %p270
      %p272 = scmp.ne.s32.totalorder %s264, %s266
      %p273 = scmp.eq.s32.totalorder %s22, 3
      %p274 = por %p272, %p273
      %p275 = scmp.ne.s32.totalorder %s266, %s267
      %p276 = scmp.eq.s32.totalorder %s22, 0
      %p277 = por %p275, %p276
      %p278 = scmp.ne.s32.totalorder %s266, %s267
      %p279 = scmp.eq.s32.totalorder %s23, 3
      %p280 = por %p278, %p279
      %p282 = scmp.ne.s32.totalorder %s267, %s281
      %p283 = scmp.eq.s32.totalorder %s23, 0
      %p284 = por %p282, %p283
      %s285 = ssub.s32 %s24, %s36
      %s286 = ssub.s32 %s25, %s32
      %s287 = sor.u32 %s285, %s286
      %p288 = scmp.eq.s32.totalorder %s287, 0
      %s290 = sadd.s32 %s289, 1
      %s291 = scalar_select %p288, %s289, %s290
      %p294 = pneg %p288
      %p295 = scmp.eq.s32.totalorder %s17, 3
      %p296 = por %p294, %p295
      %p297 = scmp.ne.s32.totalorder %s289, %s292
      %p298 = scmp.eq.s32.totalorder %s17, 0
      %p299 = por %p297, %p298
      %p300 = scmp.ne.s32.totalorder %s289, %s292
      %p301 = scmp.eq.s32.totalorder %s22, 3
      %p302 = por %p300, %p301
      %p303 = scmp.ne.s32.totalorder %s292, %s293
      %p304 = scmp.eq.s32.totalorder %s22, 0
      %p305 = por %p303, %p304
      %p306 = scmp.ne.s32.totalorder %s292, %s293
      %p307 = scmp.eq.s32.totalorder %s23, 3
      %p308 = por %p306, %p307
      %p310 = scmp.ne.s32.totalorder %s293, %s309
      %p311 = scmp.eq.s32.totalorder %s23, 0
      %p312 = por %p310, %p311
      %p313 = scmp.le.s32.totalorder 1, %s17
      %p314 = scmp.lt.s32.totalorder %s17, 5
      %p315 = pnand %p313, %p314
      %p316 = pneg %p315
      // Predicated region
      $region9: #{spatial_pyramid_pooling.3} parent=5 // pred_check
        _
      $region10: #{spatial_pyramid_pooling.3} parent=5 // pred_check_branch
        %318 = sbr.rel (%p315) target = $region12
      $region11: #{spatial_pyramid_pooling.3} parent=5 // pred_region
        %s319 = ssub.s32 %s17, 1
        // Predicated region
        $region13: #{spatial_pyramid_pooling.3} parent=11 // pred_check
          %p320 = pneg %p130
        $region14: #{spatial_pyramid_pooling.3} parent=11 // pred_check_branch
          %322 = sbr.rel (%p320) target = $region16
        $region15: #{spatial_pyramid_pooling.3} parent=11 // pred_region
          _
        $region16: #{spatial_pyramid_pooling.3} parent=11 // pred_fallthru
          _
        // Predicated region
        $region17: #{spatial_pyramid_pooling.3} parent=11 // pred_check
          %p323 = pneg %p151
        $region18: #{spatial_pyramid_pooling.3} parent=11 // pred_check_branch
          %325 = sbr.rel (%p323) target = $region20
        $region19: #{spatial_pyramid_pooling.3} parent=11 // pred_region
          _
        $region20: #{spatial_pyramid_pooling.3} parent=11 // pred_fallthru
          _
        // Predicated region
        $region21: #{spatial_pyramid_pooling.3} parent=11 // pred_check
          %p326 = pneg %p172
        $region22: #{spatial_pyramid_pooling.3} parent=11 // pred_check_branch
          %328 = sbr.rel (%p326) target = $region24
        $region23: #{spatial_pyramid_pooling.3} parent=11 // pred_region
          _
        $region24: #{spatial_pyramid_pooling.3} parent=11 // pred_fallthru
          _
        // Predicated region
        $region25: #{spatial_pyramid_pooling.3} parent=11 // pred_check
          %p329 = pneg %p193
        $region26: #{spatial_pyramid_pooling.3} parent=11 // pred_check_branch
          %331 = sbr.rel (%p329) target = $region28
        $region27: #{spatial_pyramid_pooling.3} parent=11 // pred_region
          _
        $region28: #{spatial_pyramid_pooling.3} parent=11 // pred_fallthru
          _
        // Predicated region
        $region29: #{spatial_pyramid_pooling.3} parent=11 // pred_check
          %p332 = pneg %p214
        $region30: #{spatial_pyramid_pooling.3} parent=11 // pred_check_branch
          %334 = sbr.rel (%p332) target = $region32
        $region31: #{spatial_pyramid_pooling.3} parent=11 // pred_region
          _
        $region32: #{spatial_pyramid_pooling.3} parent=11 // pred_fallthru
          _
        // Predicated region
        $region33: #{spatial_pyramid_pooling.3} parent=11 // pred_check
          %p335 = pneg %p235
        $region34: #{spatial_pyramid_pooling.3} parent=11 // pred_check_branch
          %337 = sbr.rel (%p335) target = $region36
        $region35: #{spatial_pyramid_pooling.3} parent=11 // pred_region
          _
        $region36: #{spatial_pyramid_pooling.3} parent=11 // pred_fallthru
          _
        // Predicated region
        $region37: #{spatial_pyramid_pooling.3} parent=11 // pred_check
          %p338 = pneg %p256
        $region38: #{spatial_pyramid_pooling.3} parent=11 // pred_check_branch
          %340 = sbr.rel (%p338) target = $region40
        $region39: #{spatial_pyramid_pooling.3} parent=11 // pred_region
          _
        $region40: #{spatial_pyramid_pooling.3} parent=11 // pred_fallthru
          _
        // Predicated region
        $region41: #{spatial_pyramid_pooling.3} parent=11 // pred_check
          %p341 = pneg %p277
        $region42: #{spatial_pyramid_pooling.3} parent=11 // pred_check_branch
          %343 = sbr.rel (%p341) target = $region44
        $region43: #{spatial_pyramid_pooling.3} parent=11 // pred_region
          _
        $region44: #{spatial_pyramid_pooling.3} parent=11 // pred_fallthru
          _
      $region12: #{spatial_pyramid_pooling.3} parent=5 // pred_fallthru
        _
      %p344 = scmp.lt.s32.totalorder %s17, 4
      // Predicated region
      $region45: #{spatial_pyramid_pooling.3} parent=5 // pred_check
        %p345 = pneg %p344
      $region46: #{spatial_pyramid_pooling.3} parent=5 // pred_check_branch
        %347 = sbr.rel (%p345) target = $region48
      $region47: #{spatial_pyramid_pooling.3} parent=5 // pred_region
        // Predicated region
        $region49: #{spatial_pyramid_pooling.3} parent=47 // pred_check
          %p348 = pneg %p51
        $region50: #{spatial_pyramid_pooling.3} parent=47 // pred_check_branch
          %350 = sbr.rel (%p348) target = $region52
        $region51: #{spatial_pyramid_pooling.3} parent=47 // pred_region
          %s351 = sand.u32 %s41, 1
          %s352 = sand.u32 %s41, 1
          %s353 = smul.addr %s352, 32
          %s354 = scalar_lea.vmem [#allocation3], %s353
          %s355 = smul.addr %s24, 16
          %s356 = sadd.s32 %s25, %s355
          %s357 = smul.addr %s356, 4
          %s358 = scalar_lea.vmem %s0, %s357
          // Predicated region
          $region53: #{spatial_pyramid_pooling.3} parent=51 // pred_check
            _
          $region54: #{spatial_pyramid_pooling.3} parent=51 // pred_check_branch
            %360 = sbr.rel (0) target = $region56
          $region55: #{spatial_pyramid_pooling.3} parent=51 // pred_region
            // Predicated region
            $region57: #{spatial_pyramid_pooling.3} parent=55 // pred_check
              _
            $region58: #{spatial_pyramid_pooling.3} parent=55 // pred_check_branch
              %362 = sbr.rel target = $region60
            $region59: #{spatial_pyramid_pooling.3} parent=55 // pred_region
              // Predicated region
              $region72: #{spatial_pyramid_pooling.3} parent=59 // pred_check
                _
              $region73: #{spatial_pyramid_pooling.3} parent=59 // pred_check_branch
                %392 = sbr.rel (0) target = $region75
              $region74: #{spatial_pyramid_pooling.3} parent=59 // pred_region
                loop: start=0, step=1, limit=1
                $region76: #{spatial_pyramid_pooling.3} parent=74 // loop_pre_header
                  _
                $region77: #{spatial_pyramid_pooling.3} parent=74 // loop_header
                  %s394 = sphi 0, %s398
                  %p395 = scmp.ge.s32.totalorder %s394, 1
                  %s399 = sphi %s358, %s358
                  %s400 = sphi %s354, %s354
                $region78: #{spatial_pyramid_pooling.3} parent=74 // loop_header_branch
                  %397 = sbr.rel (%p395) target = $region82
                $region79: #{spatial_pyramid_pooling.3} parent=74 // loop_body
                  _
                $region80: #{spatial_pyramid_pooling.3} parent=74 // loop_footer
                  %s398 = sadd.s32 1, %s394
                $region81: #{spatial_pyramid_pooling.3} parent=74 // loop_footer_branch
                  %393 = sbr.rel target = $region77
                $region82: #{spatial_pyramid_pooling.3} parent=74 // loop_exit
                  _
                %s402 = ssub.s32 16, 1
                loop: start=0, step=1, limit=1
                $region83: #{spatial_pyramid_pooling.3} parent=74 // loop_pre_header
                  _
                $region84: #{spatial_pyramid_pooling.3} parent=74 // loop_header
                  %s404 = sphi 0, %s408
                  %p405 = scmp.ge.s32.totalorder %s404, 1
                  %s409 = sphi %s358, %s358
                  %s410 = sphi %s354, %s354
                $region85: #{spatial_pyramid_pooling.3} parent=74 // loop_header_branch
                  %407 = sbr.rel (%p405) target = $region89
                $region86: #{spatial_pyramid_pooling.3} parent=74 // loop_body
                  %v411 = vld [vmem:[%s409] sm:%s402]
                  %412 = vst [vmem:[%s410] sm:%s402] %v411
                  %v413 = vld [vmem:[%s409 + $0x8] sm:%s402]
                  %414 = vst [vmem:[%s410 + $0x4] sm:%s402] %v413
                  %v415 = vld [vmem:[%s409 + $0x10] sm:%s402]
                  %416 = vst [vmem:[%s410 + $0x8] sm:%s402] %v415
                  %v417 = vld [vmem:[%s409 + $0x18] sm:%s402]
                  %418 = vst [vmem:[%s410 + $0xc] sm:%s402] %v417
                  %v419 = vld [vmem:[%s409 + $0x20] sm:%s402]
                  %420 = vst [vmem:[%s410 + $0x10] sm:%s402] %v419
                  %v421 = vld [vmem:[%s409 + $0x28] sm:%s402]
                  %422 = vst [vmem:[%s410 + $0x14] sm:%s402] %v421
                  %v423 = vld [vmem:[%s409 + $0x30] sm:%s402]
                  %424 = vst [vmem:[%s410 + $0x18] sm:%s402] %v423
                  %v425 = vld [vmem:[%s409 + $0x38] sm:%s402]
                  %426 = vst [vmem:[%s410 + $0x1c] sm:%s402] %v425
                $region87: #{spatial_pyramid_pooling.3} parent=74 // loop_footer
                  %s408 = sadd.s32 1, %s404
                $region88: #{spatial_pyramid_pooling.3} parent=74 // loop_footer_branch
                  %403 = sbr.rel target = $region84
                $region89: #{spatial_pyramid_pooling.3} parent=74 // loop_exit
                  _
              $region75: #{spatial_pyramid_pooling.3} parent=59 // pred_fallthru
                _
            $region60: #{spatial_pyramid_pooling.3} parent=55 // pred_fallthru
              _
            // Predicated region
            $region61: #{spatial_pyramid_pooling.3} parent=55 // pred_check
              _
            $region62: #{spatial_pyramid_pooling.3} parent=55 // pred_check_branch
              %364 = sbr.rel (0) target = $region64
            $region63: #{spatial_pyramid_pooling.3} parent=55 // pred_region
              %s366 = ssub.s32 16, 1
              loop: start=0, step=1, limit=1
              $region65: #{spatial_pyramid_pooling.3} parent=63 // loop_pre_header
                _
              $region66: #{spatial_pyramid_pooling.3} parent=63 // loop_header
                %s368 = sphi 0, %s372
                %p369 = scmp.ge.s32.totalorder %s368, 1
                %s373 = sphi %s358, %s358
                %s374 = sphi %s354, %s354
              $region67: #{spatial_pyramid_pooling.3} parent=63 // loop_header_branch
                %371 = sbr.rel (%p369) target = $region71
              $region68: #{spatial_pyramid_pooling.3} parent=63 // loop_body
                %v375 = vld [vmem:[%s373] sm:%s366]
                %376 = vst [vmem:[%s374] sm:%s366] %v375
                %v377 = vld [vmem:[%s373 + $0x8] sm:%s366]
                %378 = vst [vmem:[%s374 + $0x4] sm:%s366] %v377
                %v379 = vld [vmem:[%s373 + $0x10] sm:%s366]
                %380 = vst [vmem:[%s374 + $0x8] sm:%s366] %v379
                %v381 = vld [vmem:[%s373 + $0x18] sm:%s366]
                %382 = vst [vmem:[%s374 + $0xc] sm:%s366] %v381
                %v383 = vld [vmem:[%s373 + $0x20] sm:%s366]
                %384 = vst [vmem:[%s374 + $0x10] sm:%s366] %v383
                %v385 = vld [vmem:[%s373 + $0x28] sm:%s366]
                %386 = vst [vmem:[%s374 + $0x14] sm:%s366] %v385
                %v387 = vld [vmem:[%s373 + $0x30] sm:%s366]
                %388 = vst [vmem:[%s374 + $0x18] sm:%s366] %v387
                %v389 = vld [vmem:[%s373 + $0x38] sm:%s366]
                %390 = vst [vmem:[%s374 + $0x1c] sm:%s366] %v389
              $region69: #{spatial_pyramid_pooling.3} parent=63 // loop_footer
                %s372 = sadd.s32 1, %s368
              $region70: #{spatial_pyramid_pooling.3} parent=63 // loop_footer_branch
                %367 = sbr.rel target = $region66
              $region71: #{spatial_pyramid_pooling.3} parent=63 // loop_exit
                _
            $region64: #{spatial_pyramid_pooling.3} parent=55 // pred_fallthru
              _
          $region56: #{spatial_pyramid_pooling.3} parent=51 // pred_fallthru
            _
          %427 = vnop
        $region52: #{spatial_pyramid_pooling.3} parent=47 // pred_fallthru
          _
        // Predicated region
        $region90: #{spatial_pyramid_pooling.3} parent=47 // pred_check
          %p428 = pneg %p77
        $region91: #{spatial_pyramid_pooling.3} parent=47 // pred_check_branch
          %430 = sbr.rel (%p428) target = $region93
        $region92: #{spatial_pyramid_pooling.3} parent=47 // pred_region
          %p431 = scmp.lt.s32.totalorder %s24, 1
          %s432 = scalar_select %p431, %s24, 1
          %s433 = smul.addr %s432, 8
          %s434 = smul.addr %s433, 8
          %s435 = scalar_lea.vmem %s1, %s434
        $region93: #{spatial_pyramid_pooling.3} parent=47 // pred_fallthru
          _
        // Predicated region
        $region94: #{spatial_pyramid_pooling.3} parent=47 // pred_check
          %p436 = pneg %p103
        $region95: #{spatial_pyramid_pooling.3} parent=47 // pred_check_branch
          %438 = sbr.rel (%p436) target = $region97
        $region96: #{spatial_pyramid_pooling.3} parent=47 // pred_region
          %s439 = sand.u32 %s93, 1
          %s440 = sand.u32 %s93, 1
          %s441 = smul.addr %s440, 32
          %s442 = scalar_lea.vmem [#allocation4], %s441
          %s443 = smul.addr %s25, 4
          %s444 = scalar_lea.vmem %s2, %s443
          // Predicated region
          $region98: #{spatial_pyramid_pooling.3} parent=96 // pred_check
            _
          $region99: #{spatial_pyramid_pooling.3} parent=96 // pred_check_branch
            %446 = sbr.rel (0) target = $region101
          $region100: #{spatial_pyramid_pooling.3} parent=96 // pred_region
            // Predicated region
            $region102: #{spatial_pyramid_pooling.3} parent=100 // pred_check
              _
            $region103: #{spatial_pyramid_pooling.3} parent=100 // pred_check_branch
              %448 = sbr.rel target = $region105
            $region104: #{spatial_pyramid_pooling.3} parent=100 // pred_region
              // Predicated region
              $region117: #{spatial_pyramid_pooling.3} parent=104 // pred_check
                _
              $region118: #{spatial_pyramid_pooling.3} parent=104 // pred_check_branch
                %478 = sbr.rel (0) target = $region120
              $region119: #{spatial_pyramid_pooling.3} parent=104 // pred_region
                loop: start=0, step=1, limit=1
                $region121: #{spatial_pyramid_pooling.3} parent=119 // loop_pre_header
                  _
                $region122: #{spatial_pyramid_pooling.3} parent=119 // loop_header
                  %s480 = sphi 0, %s484
                  %p481 = scmp.ge.s32.totalorder %s480, 1
                  %s485 = sphi %s444, %s444
                  %s486 = sphi %s442, %s442
                $region123: #{spatial_pyramid_pooling.3} parent=119 // loop_header_branch
                  %483 = sbr.rel (%p481) target = $region127
                $region124: #{spatial_pyramid_pooling.3} parent=119 // loop_body
                  _
                $region125: #{spatial_pyramid_pooling.3} parent=119 // loop_footer
                  %s484 = sadd.s32 1, %s480
                $region126: #{spatial_pyramid_pooling.3} parent=119 // loop_footer_branch
                  %479 = sbr.rel target = $region122
                $region127: #{spatial_pyramid_pooling.3} parent=119 // loop_exit
                  _
                %s488 = ssub.s32 16, 1
                loop: start=0, step=1, limit=1
                $region128: #{spatial_pyramid_pooling.3} parent=119 // loop_pre_header
                  _
                $region129: #{spatial_pyramid_pooling.3} parent=119 // loop_header
                  %s490 = sphi 0, %s494
                  %p491 = scmp.ge.s32.totalorder %s490, 1
                  %s495 = sphi %s444, %s444
                  %s496 = sphi %s442, %s442
                $region130: #{spatial_pyramid_pooling.3} parent=119 // loop_header_branch
                  %493 = sbr.rel (%p491) target = $region134
                $region131: #{spatial_pyramid_pooling.3} parent=119 // loop_body
                  %v497 = vld [vmem:[%s495] sm:%s488]
                  %498 = vst [vmem:[%s496] sm:%s488] %v497
                  %v499 = vld [vmem:[%s495 + $0x8] sm:%s488]
                  %500 = vst [vmem:[%s496 + $0x4] sm:%s488] %v499
                  %v501 = vld [vmem:[%s495 + $0x10] sm:%s488]
                  %502 = vst [vmem:[%s496 + $0x8] sm:%s488] %v501
                  %v503 = vld [vmem:[%s495 + $0x18] sm:%s488]
                  %504 = vst [vmem:[%s496 + $0xc] sm:%s488] %v503
                  %v505 = vld [vmem:[%s495 + $0x20] sm:%s488]
                  %506 = vst [vmem:[%s496 + $0x10] sm:%s488] %v505
                  %v507 = vld [vmem:[%s495 + $0x28] sm:%s488]
                  %508 = vst [vmem:[%s496 + $0x14] sm:%s488] %v507
                  %v509 = vld [vmem:[%s495 + $0x30] sm:%s488]
                  %510 = vst [vmem:[%s496 + $0x18] sm:%s488] %v509
                  %v511 = vld [vmem:[%s495 + $0x38] sm:%s488]
                  %512 = vst [vmem:[%s496 + $0x1c] sm:%s488] %v511
                $region132: #{spatial_pyramid_pooling.3} parent=119 // loop_footer
                  %s494 = sadd.s32 1, %s490
                $region133: #{spatial_pyramid_pooling.3} parent=119 // loop_footer_branch
                  %489 = sbr.rel target = $region129
                $region134: #{spatial_pyramid_pooling.3} parent=119 // loop_exit
                  _
              $region120: #{spatial_pyramid_pooling.3} parent=104 // pred_fallthru
                _
            $region105: #{spatial_pyramid_pooling.3} parent=100 // pred_fallthru
              _
            // Predicated region
            $region106: #{spatial_pyramid_pooling.3} parent=100 // pred_check
              _
            $region107: #{spatial_pyramid_pooling.3} parent=100 // pred_check_branch
              %450 = sbr.rel (0) target = $region109
            $region108: #{spatial_pyramid_pooling.3} parent=100 // pred_region
              %s452 = ssub.s32 16, 1
              loop: start=0, step=1, limit=1
              $region110: #{spatial_pyramid_pooling.3} parent=108 // loop_pre_header
                _
              $region111: #{spatial_pyramid_pooling.3} parent=108 // loop_header
                %s454 = sphi 0, %s458
                %p455 = scmp.ge.s32.totalorder %s454, 1
                %s459 = sphi %s444, %s444
                %s460 = sphi %s442, %s442
              $region112: #{spatial_pyramid_pooling.3} parent=108 // loop_header_branch
                %457 = sbr.rel (%p455) target = $region116
              $region113: #{spatial_pyramid_pooling.3} parent=108 // loop_body
                %v461 = vld [vmem:[%s459] sm:%s452]
                %462 = vst [vmem:[%s460] sm:%s452] %v461
                %v463 = vld [vmem:[%s459 + $0x8] sm:%s452]
                %464 = vst [vmem:[%s460 + $0x4] sm:%s452] %v463
                %v465 = vld [vmem:[%s459 + $0x10] sm:%s452]
                %466 = vst [vmem:[%s460 + $0x8] sm:%s452] %v465
                %v467 = vld [vmem:[%s459 + $0x18] sm:%s452]
                %468 = vst [vmem:[%s460 + $0xc] sm:%s452] %v467
                %v469 = vld [vmem:[%s459 + $0x20] sm:%s452]
                %470 = vst [vmem:[%s460 + $0x10] sm:%s452] %v469
                %v471 = vld [vmem:[%s459 + $0x28] sm:%s452]
                %472 = vst [vmem:[%s460 + $0x14] sm:%s452] %v471
                %v473 = vld [vmem:[%s459 + $0x30] sm:%s452]
                %474 = vst [vmem:[%s460 + $0x18] sm:%s452] %v473
                %v475 = vld [vmem:[%s459 + $0x38] sm:%s452]
                %476 = vst [vmem:[%s460 + $0x1c] sm:%s452] %v475
              $region114: #{spatial_pyramid_pooling.3} parent=108 // loop_footer
                %s458 = sadd.s32 1, %s454
              $region115: #{spatial_pyramid_pooling.3} parent=108 // loop_footer_branch
                %453 = sbr.rel target = $region111
              $region116: #{spatial_pyramid_pooling.3} parent=108 // loop_exit
                _
            $region109: #{spatial_pyramid_pooling.3} parent=100 // pred_fallthru
              _
          $region101: #{spatial_pyramid_pooling.3} parent=96 // pred_fallthru
            _
          %513 = vnop
        $region97: #{spatial_pyramid_pooling.3} parent=47 // pred_fallthru
          _
      $region48: #{spatial_pyramid_pooling.3} parent=5 // pred_fallthru
        _
      %p514 = scmp.le.s32.totalorder 1, %s17
      %p515 = scmp.lt.s32.totalorder %s17, 5
      %p516 = pnand %p514, %p515
      %p517 = pneg %p516
      // Predicated region
      $region135: #{spatial_pyramid_pooling.3} parent=5 // pred_check
        _
      $region136: #{spatial_pyramid_pooling.3} parent=5 // pred_check_branch
        %519 = sbr.rel (%p516) target = $region138
      $region137: #{spatial_pyramid_pooling.3} parent=5 // pred_region
        %s520 = ssub.s32 %s17, 1
        %s521 = sand.u32 %s44, 1
        %s522 = sand.u32 %s44, 1
        %s523 = smul.addr %s522, 32
        %s524 = scalar_lea.vmem [#allocation3], %s523
        // Predicated region
        $region139: #{spatial_pyramid_pooling.3} parent=137 // pred_check
          %p525 = pneg %p57
        $region140: #{spatial_pyramid_pooling.3} parent=137 // pred_check_branch
          %527 = sbr.rel (%p525) target = $region142
        $region141: #{spatial_pyramid_pooling.3} parent=137 // pred_region
          _
        $region142: #{spatial_pyramid_pooling.3} parent=137 // pred_fallthru
          _
        %s528 = sand.u32 %s96, 1
        %s529 = sand.u32 %s96, 1
        %s530 = smul.addr %s529, 32
        %s531 = scalar_lea.vmem [#allocation4], %s530
        // Predicated region
        $region143: #{spatial_pyramid_pooling.3} parent=137 // pred_check
          %p532 = pneg %p109
        $region144: #{spatial_pyramid_pooling.3} parent=137 // pred_check_branch
          %534 = sbr.rel (%p532) target = $region146
        $region145: #{spatial_pyramid_pooling.3} parent=137 // pred_region
          _
        $region146: #{spatial_pyramid_pooling.3} parent=137 // pred_fallthru
          _
        %s535 = sand.u32 %s44, 1
        %s536 = sand.u32 %s44, 1
        %s537 = smul.addr %s536, 32
        %s538 = scalar_lea.vmem [#allocation3], %s537
        %p539 = pneg %p57
        %p540 = pneg %p54
        %p541 = scmp.lt.s32.totalorder %s26, 1
        %s542 = scalar_select %p541, %s26, 1
        %s543 = smul.addr %s542, 8
        %s544 = smul.addr %s543, 8
        %s545 = scalar_lea.vmem %s1, %s544
        %p546 = pneg %p83
        %p547 = pneg %p80
        %s548 = sand.u32 %s96, 1
        %s549 = sand.u32 %s96, 1
        %s550 = smul.addr %s549, 32
        %s551 = scalar_lea.vmem [#allocation4], %s550
        %p552 = pneg %p109
        %p553 = pneg %p106
        %p554 = pneg %p130
        %p555 = pneg %p127
        %p556 = pneg %p151
        %p557 = pneg %p148
        %p558 = pneg %p172
        %p559 = pneg %p169
        %p560 = pneg %p193
        %p561 = pneg %p190
        %p562 = pneg %p214
        %p563 = pneg %p211
        %p564 = pneg %p235
        %p565 = pneg %p232
        %p566 = pneg %p256
        %p567 = pneg %p253
        %p568 = pneg %p277
        %p569 = pneg %p274
        %p570 = pneg %p305
        %p571 = pneg %p302
        %s572 = sand.u32 %s292, 1
        %s573 = sand.u32 %s292, 1
        %s574 = smul.addr %s573, 32
        %s575 = scalar_lea.vmem [#allocation5], %s574
        %p576 = scmp.lt.s32.totalorder %s26, 1
        %s577 = scalar_select %p576, %s26, 1
        %s578 = smul.addr %s577, 8
        %s579 = smul.addr %s578, 8
        %s580 = scalar_lea.vmem %s1, %s579
        %p582 = scmp.eq.s32.totalorder %s27, 0
        // Predicated region
        $region147: #{spatial_pyramid_pooling.3} parent=137 // pred_check
          %p583 = pneg %p582
        $region148: #{spatial_pyramid_pooling.3} parent=137 // pred_check_branch
          %585 = sbr.rel (%p583) target = $region150
        $region149: #{spatial_pyramid_pooling.3} parent=137 // pred_region
          %v586 = vld [vmem:[%s580] sm:$0xff]
          %v587 = vld [vmem:[%s580 + $0x8] sm:$0xff]
          %v588 = vld [vmem:[%s580 + $0x10] sm:$0xff]
          %v589 = vld [vmem:[%s580 + $0x18] sm:$0xff]
          %v590 = vld [vmem:[%s580 + $0x20] sm:$0xff]
          %v591 = vld [vmem:[%s580 + $0x28] sm:$0xff]
          %v592 = vld [vmem:[%s580 + $0x30] sm:$0xff]
          %v593 = vld [vmem:[%s580 + $0x38] sm:$0xff]
          %v594 = vld [vmem:[%s5] sm:$0xff]
          %v595 = vld [vmem:[%s5 + $0x8] sm:$0xff]
          %v596 = vld [vmem:[%s5 + $0x10] sm:$0xff]
          %v597 = vld [vmem:[%s5 + $0x18] sm:$0xff]
          %v598 = vld [vmem:[%s5 + $0x20] sm:$0xff]
          %v599 = vld [vmem:[%s5 + $0x28] sm:$0xff]
          %v600 = vld [vmem:[%s5 + $0x30] sm:$0xff]
          %v601 = vld [vmem:[%s5 + $0x38] sm:$0xff]
          %v602 = vmul.f32 %v586, %v594
          %v603 = vmul.f32 %v587, %v595
          %v604 = vmul.f32 %v588, %v596
          %v605 = vmul.f32 %v589, %v597
          %v606 = vmul.f32 %v590, %v598
          %v607 = vmul.f32 %v591, %v599
          %v608 = vmul.f32 %v592, %v600
          %v609 = vmul.f32 %v593, %v601
          %v610 = vld [vmem:[%s6] sm:$0xff]
          %v611 = vld [vmem:[%s6 + $0x8] sm:$0xff]
          %v612 = vld [vmem:[%s6 + $0x10] sm:$0xff]
          %v613 = vld [vmem:[%s6 + $0x18] sm:$0xff]
          %v614 = vld [vmem:[%s6 + $0x20] sm:$0xff]
          %v615 = vld [vmem:[%s6 + $0x28] sm:$0xff]
          %v616 = vld [vmem:[%s6 + $0x30] sm:$0xff]
          %v617 = vld [vmem:[%s6 + $0x38] sm:$0xff]
          %v618 = vadd.f32 %v602, %v610
          %v619 = vadd.f32 %v603, %v611
          %v620 = vadd.f32 %v604, %v612
          %v621 = vadd.f32 %v605, %v613
          %v622 = vadd.f32 %v606, %v614
          %v623 = vadd.f32 %v607, %v615
          %v624 = vadd.f32 %v608, %v616
          %v625 = vadd.f32 %v609, %v617
          %v626 = vmax.f32 %v618, 0.0
          %v627 = vmax.f32 %v619, 0.0
          %v628 = vmax.f32 %v620, 0.0
          %v629 = vmax.f32 %v621, 0.0
          %v630 = vmax.f32 %v622, 0.0
          %v631 = vmax.f32 %v623, 0.0
          %v632 = vmax.f32 %v624, 0.0
          %v633 = vmax.f32 %v625, 0.0
          %v634 = vld [vmem:[%s7] sm:$0xf]
          %v635 = vld [vmem:[%s7 + $0x4] sm:$0xf]
          %v636 = vld [vmem:[%s7 + $0x8] sm:$0xf]
          %v637 = vld [vmem:[%s7 + $0xc] sm:$0xf]
          %v638 = vld [vmem:[%s7 + $0x10] sm:$0xf]
          %v639 = vld [vmem:[%s7 + $0x14] sm:$0xf]
          %v640 = vld [vmem:[%s7 + $0x18] sm:$0xf]
          %v641 = vld [vmem:[%s7 + $0x1c] sm:$0xf]
          %v642 = vld [vmem:[%s7 + $0x20] sm:$0xf]
          %v643 = vld [vmem:[%s7 + $0x24] sm:$0xf]
          %v644 = vld [vmem:[%s7 + $0x28] sm:$0xf]
          %v645 = vld [vmem:[%s7 + $0x2c] sm:$0xf]
          %v646 = vld [vmem:[%s7 + $0x30] sm:$0xf]
          %v647 = vld [vmem:[%s7 + $0x34] sm:$0xf]
          %v648 = vld [vmem:[%s7 + $0x38] sm:$0xf]
          %v649 = vld [vmem:[%s7 + $0x3c] sm:$0xf]
          %v650 = vpack.c.bf16 %v627, %v626
          %v651 = vpack.c.bf16 %v629, %v628
          %v652 = vpack.c.bf16 %v631, %v630
          %v653 = vpack.c.bf16 %v633, %v632
          %v670 = vunpack.c.l.b16 %v634
          %v671 = vunpack.c.l.b16 %v635
          %v672 = vunpack.c.l.b16 %v636
          %v673 = vunpack.c.l.b16 %v637
          %v674 = vunpack.c.l.b16 %v638
          %v675 = vunpack.c.l.b16 %v639
          %v676 = vunpack.c.l.b16 %v640
          %v677 = vunpack.c.l.b16 %v641
          %v678 = vunpack.c.l.b16 %v642
          %v679 = vunpack.c.l.b16 %v643
          %v680 = vunpack.c.l.b16 %v644
          %v681 = vunpack.c.l.b16 %v645
          %v682 = vunpack.c.l.b16 %v646
          %v683 = vunpack.c.l.b16 %v647
          %v684 = vunpack.c.l.b16 %v648
          %v685 = vunpack.c.l.b16 %v649
          %v686 = vpack.c.b16 %v671, %v670
          %v687 = vpack.c.b16 %v673, %v672
          %v688 = vpack.c.b16 %v675, %v674
          %v689 = vpack.c.b16 %v677, %v676
          %v690 = vpack.c.b16 %v679, %v678
          %v691 = vpack.c.b16 %v681, %v680
          %v692 = vpack.c.b16 %v683, %v682
          %v693 = vpack.c.b16 %v685, %v684
          %vm694 = vcmask 523264
          %v696 = vsel %vm694, %v686, 0
          %v699 = vsel %vm694, %v687, 0
          %v702 = vsel %vm694, %v688, 0
          %v705 = vsel %vm694, %v689, 0
          %v708 = vsel %vm694, %v690, 0
          %v711 = vsel %vm694, %v691, 0
          %v714 = vsel %vm694, %v692, 0
          %v717 = vsel %vm694, %v693, 0
          %719 = vmatpush.bf16.msra.mxu0 0
          %720 = vmatpush.bf16.msra.mxu0 0
          %721 = vmatpush.bf16.msra.mxu0 0
          %722 = vmatpush.bf16.msra.mxu0 0
          %723 = vmatpush.bf16.msra.mxu0 %v653
          %724 = vmatpush.bf16.msra.mxu0 %v652
          %725 = vmatpush.bf16.msra.mxu0 %v651
          %726 = vmatpush.bf16.msra.mxu0 %v650
          %727 = vmatmul.bf16.gmra.mxu0 %v696
          %v728 = vpop.f32.mrf.mxu0
          %v729 = vadd.f32 0.0, %v728
          %v730 = vpop.f32.mrf.mxu0
          %v731 = vadd.f32 0.0, %v730
          %732 = vmatmul.bf16.gmra.mxu0 %v699
          %v733 = vpop.f32.mrf.mxu0
          %v734 = vadd.f32 0.0, %v733
          %v735 = vpop.f32.mrf.mxu0
          %v736 = vadd.f32 0.0, %v735
          %737 = vmatmul.bf16.gmra.mxu0 %v702
          %v738 = vpop.f32.mrf.mxu0
          %v739 = vadd.f32 0.0, %v738
          %v740 = vpop.f32.mrf.mxu0
          %v741 = vadd.f32 0.0, %v740
          %742 = vmatmul.bf16.gmra.mxu0 %v705
          %v743 = vpop.f32.mrf.mxu0
          %v744 = vadd.f32 0.0, %v743
          %v745 = vpop.f32.mrf.mxu0
          %v746 = vadd.f32 0.0, %v745
          %747 = vmatmul.bf16.gmra.mxu0 %v708
          %v748 = vpop.f32.mrf.mxu0
          %v749 = vadd.f32 0.0, %v748
          %v750 = vpop.f32.mrf.mxu0
          %v751 = vadd.f32 0.0, %v750
          %752 = vmatmul.bf16.gmra.mxu0 %v711
          %v753 = vpop.f32.mrf.mxu0
          %v754 = vadd.f32 0.0, %v753
          %v755 = vpop.f32.mrf.mxu0
          %v756 = vadd.f32 0.0, %v755
          %757 = vmatmul.bf16.gmra.mxu0 %v714
          %v758 = vpop.f32.mrf.mxu0
          %v759 = vadd.f32 0.0, %v758
          %v760 = vpop.f32.mrf.mxu0
          %v761 = vadd.f32 0.0, %v760
          %762 = vmatmul.bf16.gmra.mxu0 %v717
          %v763 = vpop.f32.mrf.mxu0
          %v764 = vadd.f32 0.0, %v763
          %v765 = vpop.f32.mrf.mxu0
          %v766 = vadd.f32 0.0, %v765
          %767 = vdwg.mxu0
          %v768 = vld [vmem:[%s8] sm:$0xff]
          %v769 = vld [vmem:[%s8 + $0x8] sm:$0xff]
          %v770 = vld [vmem:[%s8 + $0x10] sm:$0xff]
          %v771 = vld [vmem:[%s8 + $0x18] sm:$0xff]
          %v772 = vld [vmem:[%s8 + $0x20] sm:$0xff]
          %v773 = vld [vmem:[%s8 + $0x28] sm:$0xff]
          %v774 = vld [vmem:[%s8 + $0x30] sm:$0xff]
          %v775 = vld [vmem:[%s8 + $0x38] sm:$0xff]
          %v776 = vld [vmem:[%s8 + $0x40] sm:$0xff]
          %v777 = vld [vmem:[%s8 + $0x48] sm:$0xff]
          %v778 = vld [vmem:[%s8 + $0x50] sm:$0xff]
          %v779 = vld [vmem:[%s8 + $0x58] sm:$0xff]
          %v780 = vld [vmem:[%s8 + $0x60] sm:$0xff]
          %v781 = vld [vmem:[%s8 + $0x68] sm:$0xff]
          %v782 = vld [vmem:[%s8 + $0x70] sm:$0xff]
          %v783 = vld [vmem:[%s8 + $0x78] sm:$0xff]
          %v784 = vmul.f32 %v729, %v768
          %v785 = vmul.f32 %v731, %v769
          %v786 = vmul.f32 %v734, %v770
          %v787 = vmul.f32 %v736, %v771
          %v788 = vmul.f32 %v739, %v772
          %v789 = vmul.f32 %v741, %v773
          %v790 = vmul.f32 %v744, %v774
          %v791 = vmul.f32 %v746, %v775
          %v792 = vmul.f32 %v749, %v776
          %v793 = vmul.f32 %v751, %v777
          %v794 = vmul.f32 %v754, %v778
          %v795 = vmul.f32 %v756, %v779
          %v796 = vmul.f32 %v759, %v780
          %v797 = vmul.f32 %v761, %v781
          %v798 = vmul.f32 %v764, %v782
          %v799 = vmul.f32 %v766, %v783
          %v800 = vpack.c.bf16 %v784, %v784
          %v801 = vpack.c.bf16 %v785, %v785
          %v802 = vpack.c.bf16 %v786, %v786
          %v803 = vpack.c.bf16 %v787, %v787
          %v804 = vpack.c.bf16 %v788, %v788
          %v805 = vpack.c.bf16 %v789, %v789
          %v806 = vpack.c.bf16 %v790, %v790
          %v807 = vpack.c.bf16 %v791, %v791
          %v808 = vpack.c.bf16 %v792, %v792
          %v809 = vpack.c.bf16 %v793, %v793
          %v810 = vpack.c.bf16 %v794, %v794
          %v811 = vpack.c.bf16 %v795, %v795
          %v812 = vpack.c.bf16 %v796, %v796
          %v813 = vpack.c.bf16 %v797, %v797
          %v814 = vpack.c.bf16 %v798, %v798
          %v815 = vpack.c.bf16 %v799, %v799
          %vm816 = vcmask 519168
          %817 = vst.msk [vmem:[#allocation2] sm:$0xf] %vm816, %v800
          %818 = vst.msk [vmem:[#allocation2 + $0x4] sm:$0xf] %vm816, %v801
          %819 = vst.msk [vmem:[#allocation2 + $0x8] sm:$0xf] %vm816, %v802
          %820 = vst.msk [vmem:[#allocation2 + $0xc] sm:$0xf] %vm816, %v803
          %821 = vst.msk [vmem:[#allocation2 + $0x10] sm:$0xf] %vm816, %v804
          %822 = vst.msk [vmem:[#allocation2 + $0x14] sm:$0xf] %vm816, %v805
          %823 = vst.msk [vmem:[#allocation2 + $0x18] sm:$0xf] %vm816, %v806
          %824 = vst.msk [vmem:[#allocation2 + $0x1c] sm:$0xf] %vm816, %v807
          %825 = vst.msk [vmem:[#allocation2 + $0x20] sm:$0xf] %vm816, %v808
          %826 = vst.msk [vmem:[#allocation2 + $0x24] sm:$0xf] %vm816, %v809
          %827 = vst.msk [vmem:[#allocation2 + $0x28] sm:$0xf] %vm816, %v810
          %828 = vst.msk [vmem:[#allocation2 + $0x2c] sm:$0xf] %vm816, %v811
          %829 = vst.msk [vmem:[#allocation2 + $0x30] sm:$0xf] %vm816, %v812
          %830 = vst.msk [vmem:[#allocation2 + $0x34] sm:$0xf] %vm816, %v813
          %831 = vst.msk [vmem:[#allocation2 + $0x38] sm:$0xf] %vm816, %v814
          %832 = vst.msk [vmem:[#allocation2 + $0x3c] sm:$0xf] %vm816, %v815
        $region150: #{spatial_pyramid_pooling.3} parent=137 // pred_fallthru
          _
        %v833 = vld [vmem:[%s524] sm:$0xf]
        %v834 = vld [vmem:[%s524 + $0x4] sm:$0xf]
        %v835 = vld [vmem:[%s524 + $0x8] sm:$0xf]
        %v836 = vld [vmem:[%s524 + $0xc] sm:$0xf]
        %v837 = vld [vmem:[%s524 + $0x10] sm:$0xf]
        %v838 = vld [vmem:[%s524 + $0x14] sm:$0xf]
        %v839 = vld [vmem:[%s524 + $0x18] sm:$0xf]
        %v840 = vld [vmem:[%s524 + $0x1c] sm:$0xf]
        %v841 = vunpack.c.l.bf16 %v833
        %v842 = vunpack.c.l.bf16 %v834
        %v843 = vunpack.c.l.bf16 %v835
        %v844 = vunpack.c.l.bf16 %v836
        %v845 = vunpack.c.l.bf16 %v837
        %v846 = vunpack.c.l.bf16 %v838
        %v847 = vunpack.c.l.bf16 %v839
        %v848 = vunpack.c.l.bf16 %v840
        %v849 = vld [vmem:[%s3] sm:$0xff]
        %v850 = vld [vmem:[%s3 + $0x8] sm:$0xff]
        %v851 = vld [vmem:[%s3 + $0x10] sm:$0xff]
        %v852 = vld [vmem:[%s3 + $0x18] sm:$0xff]
        %v853 = vld [vmem:[%s3 + $0x20] sm:$0xff]
        %v854 = vld [vmem:[%s3 + $0x28] sm:$0xff]
        %v855 = vld [vmem:[%s3 + $0x30] sm:$0xff]
        %v856 = vld [vmem:[%s3 + $0x38] sm:$0xff]
        %858 = vset.pattern.permute.xlu0 0
        %859 = vperm.xlu0 %858, %v849
        %v860 = vpop.permute.xlu0 %859
        %863 = vset.pattern.permute.xlu0 0
        %864 = vperm.xlu0 %863, %v850
        %v865 = vpop.permute.xlu0 %864
        %868 = vset.pattern.permute.xlu0 0
        %869 = vperm.xlu0 %868, %v851
        %v870 = vpop.permute.xlu0 %869
        %873 = vset.pattern.permute.xlu0 0
        %874 = vperm.xlu0 %873, %v852
        %v875 = vpop.permute.xlu0 %874
        %878 = vset.pattern.permute.xlu0 0
        %879 = vperm.xlu0 %878, %v853
        %v880 = vpop.permute.xlu0 %879
        %883 = vset.pattern.permute.xlu0 0
        %884 = vperm.xlu0 %883, %v854
        %v885 = vpop.permute.xlu0 %884
        %888 = vset.pattern.permute.xlu0 0
        %889 = vperm.xlu0 %888, %v855
        %v890 = vpop.permute.xlu0 %889
        %893 = vset.pattern.permute.xlu0 0
        %894 = vperm.xlu0 %893, %v856
        %v895 = vpop.permute.xlu0 %894
        %v897 = vmul.f32 %v841, %v860
        %v898 = vmul.f32 %v842, %v865
        %v899 = vmul.f32 %v843, %v870
        %v900 = vmul.f32 %v844, %v875
        %v901 = vmul.f32 %v845, %v880
        %v902 = vmul.f32 %v846, %v885
        %v903 = vmul.f32 %v847, %v890
        %v904 = vmul.f32 %v848, %v895
        %v905 = vld [vmem:[%s4] sm:$0xff]
        %v906 = vld [vmem:[%s4 + $0x8] sm:$0xff]
        %v907 = vld [vmem:[%s4 + $0x10] sm:$0xff]
        %v908 = vld [vmem:[%s4 + $0x18] sm:$0xff]
        %v909 = vld [vmem:[%s4 + $0x20] sm:$0xff]
        %v910 = vld [vmem:[%s4 + $0x28] sm:$0xff]
        %v911 = vld [vmem:[%s4 + $0x30] sm:$0xff]
        %v912 = vld [vmem:[%s4 + $0x38] sm:$0xff]
        %914 = vset.pattern.permute.xlu0 0
        %915 = vperm.xlu0 %914, %v905
        %v916 = vpop.permute.xlu0 %915
        %919 = vset.pattern.permute.xlu0 0
        %920 = vperm.xlu0 %919, %v906
        %v921 = vpop.permute.xlu0 %920
        %924 = vset.pattern.permute.xlu0 0
        %925 = vperm.xlu0 %924, %v907
        %v926 = vpop.permute.xlu0 %925
        %929 = vset.pattern.permute.xlu0 0
        %930 = vperm.xlu0 %929, %v908
        %v931 = vpop.permute.xlu0 %930
        %934 = vset.pattern.permute.xlu0 0
        %935 = vperm.xlu0 %934, %v909
        %v936 = vpop.permute.xlu0 %935
        %939 = vset.pattern.permute.xlu0 0
        %940 = vperm.xlu0 %939, %v910
        %v941 = vpop.permute.xlu0 %940
        %944 = vset.pattern.permute.xlu0 0
        %945 = vperm.xlu0 %944, %v911
        %v946 = vpop.permute.xlu0 %945
        %949 = vset.pattern.permute.xlu0 0
        %950 = vperm.xlu0 %949, %v912
        %v951 = vpop.permute.xlu0 %950
        %v953 = vadd.f32 %v897, %v916
        %v954 = vadd.f32 %v898, %v921
        %v955 = vadd.f32 %v899, %v926
        %v956 = vadd.f32 %v900, %v931
        %v957 = vadd.f32 %v901, %v936
        %v958 = vadd.f32 %v902, %v941
        %v959 = vadd.f32 %v903, %v946
        %v960 = vadd.f32 %v904, %v951
        %v961 = vmax.f32 %v953, 0.0
        %v962 = vmax.f32 %v954, 0.0
        %v963 = vmax.f32 %v955, 0.0
        %v964 = vmax.f32 %v956, 0.0
        %v965 = vmax.f32 %v957, 0.0
        %v966 = vmax.f32 %v958, 0.0
        %v967 = vmax.f32 %v959, 0.0
        %v968 = vmax.f32 %v960, 0.0
        %v969 = vld [vmem:[#allocation2] sm:$0xf]
        %v970 = vld [vmem:[#allocation2 + $0x4] sm:$0xf]
        %v971 = vld [vmem:[#allocation2 + $0x8] sm:$0xf]
        %v972 = vld [vmem:[#allocation2 + $0xc] sm:$0xf]
        %v973 = vld [vmem:[#allocation2 + $0x10] sm:$0xf]
        %v974 = vld [vmem:[#allocation2 + $0x14] sm:$0xf]
        %v975 = vld [vmem:[#allocation2 + $0x18] sm:$0xf]
        %v976 = vld [vmem:[#allocation2 + $0x1c] sm:$0xf]
        %v977 = vld [vmem:[#allocation2 + $0x20] sm:$0xf]
        %v978 = vld [vmem:[#allocation2 + $0x24] sm:$0xf]
        %v979 = vld [vmem:[#allocation2 + $0x28] sm:$0xf]
        %v980 = vld [vmem:[#allocation2 + $0x2c] sm:$0xf]
        %v981 = vld [vmem:[#allocation2 + $0x30] sm:$0xf]
        %v982 = vld [vmem:[#allocation2 + $0x34] sm:$0xf]
        %v983 = vld [vmem:[#allocation2 + $0x38] sm:$0xf]
        %v984 = vld [vmem:[#allocation2 + $0x3c] sm:$0xf]
        %v985 = vld [vmem:[%s531] sm:$0xf]
        %v986 = vld [vmem:[%s531 + $0x4] sm:$0xf]
        %v987 = vld [vmem:[%s531 + $0x8] sm:$0xf]
        %v988 = vld [vmem:[%s531 + $0xc] sm:$0xf]
        %v989 = vld [vmem:[%s531 + $0x10] sm:$0xf]
        %v990 = vld [vmem:[%s531 + $0x14] sm:$0xf]
        %v991 = vld [vmem:[%s531 + $0x18] sm:$0xf]
        %v992 = vld [vmem:[%s531 + $0x1c] sm:$0xf]
        %v993 = vld [vmem:[%s9] sm:$0xff]
        %v994 = vld [vmem:[%s9 + $0x8] sm:$0xff]
        %v995 = vld [vmem:[%s9 + $0x10] sm:$0xff]
        %v996 = vld [vmem:[%s9 + $0x18] sm:$0xff]
        %v997 = vld [vmem:[%s9 + $0x20] sm:$0xff]
        %v998 = vld [vmem:[%s9 + $0x28] sm:$0xff]
        %v999 = vld [vmem:[%s9 + $0x30] sm:$0xff]
        %v1000 = vld [vmem:[%s9 + $0x38] sm:$0xff]
        %v1001 = vld [vmem:[%s9 + $0x40] sm:$0xff]
        %v1002 = vld [vmem:[%s9 + $0x48] sm:$0xff]
        %v1003 = vld [vmem:[%s9 + $0x50] sm:$0xff]
        %v1004 = vld [vmem:[%s9 + $0x58] sm:$0xff]
        %v1005 = vld [vmem:[%s9 + $0x60] sm:$0xff]
        %v1006 = vld [vmem:[%s9 + $0x68] sm:$0xff]
        %v1007 = vld [vmem:[%s9 + $0x70] sm:$0xff]
        %v1008 = vld [vmem:[%s9 + $0x78] sm:$0xff]
        %1010 = vset.pattern.permute.xlu0 0
        %1011 = vperm.xlu0 %1010, %v993
        %v1012 = vpop.permute.xlu0 %1011
        %1015 = vset.pattern.permute.xlu0 0
        %1016 = vperm.xlu0 %1015, %v994
        %v1017 = vpop.permute.xlu0 %1016
        %1020 = vset.pattern.permute.xlu0 0
        %1021 = vperm.xlu0 %1020, %v995
        %v1022 = vpop.permute.xlu0 %1021
        %1025 = vset.pattern.permute.xlu0 0
        %1026 = vperm.xlu0 %1025, %v996
        %v1027 = vpop.permute.xlu0 %1026
        %1030 = vset.pattern.permute.xlu0 0
        %1031 = vperm.xlu0 %1030, %v997
        %v1032 = vpop.permute.xlu0 %1031
        %1035 = vset.pattern.permute.xlu0 0
        %1036 = vperm.xlu0 %1035, %v998
        %v1037 = vpop.permute.xlu0 %1036
        %1040 = vset.pattern.permute.xlu0 0
        %1041 = vperm.xlu0 %1040, %v999
        %v1042 = vpop.permute.xlu0 %1041
        %1045 = vset.pattern.permute.xlu0 0
        %1046 = vperm.xlu0 %1045, %v1000
        %v1047 = vpop.permute.xlu0 %1046
        %1050 = vset.pattern.permute.xlu0 0
        %1051 = vperm.xlu0 %1050, %v1001
        %v1052 = vpop.permute.xlu0 %1051
        %1055 = vset.pattern.permute.xlu0 0
        %1056 = vperm.xlu0 %1055, %v1002
        %v1057 = vpop.permute.xlu0 %1056
        %1060 = vset.pattern.permute.xlu0 0
        %1061 = vperm.xlu0 %1060, %v1003
        %v1062 = vpop.permute.xlu0 %1061
        %1065 = vset.pattern.permute.xlu0 0
        %1066 = vperm.xlu0 %1065, %v1004
        %v1067 = vpop.permute.xlu0 %1066
        %1070 = vset.pattern.permute.xlu0 0
        %1071 = vperm.xlu0 %1070, %v1005
        %v1072 = vpop.permute.xlu0 %1071
        %1075 = vset.pattern.permute.xlu0 0
        %1076 = vperm.xlu0 %1075, %v1006
        %v1077 = vpop.permute.xlu0 %1076
        %1080 = vset.pattern.permute.xlu0 0
        %1081 = vperm.xlu0 %1080, %v1007
        %v1082 = vpop.permute.xlu0 %1081
        %1085 = vset.pattern.permute.xlu0 0
        %1086 = vperm.xlu0 %1085, %v1008
        %v1087 = vpop.permute.xlu0 %1086
        %v1105 = vunpack.c.l.b16 %v969
        %v1106 = vunpack.c.l.b16 %v970
        %v1107 = vunpack.c.l.b16 %v971
        %v1108 = vunpack.c.l.b16 %v972
        %v1109 = vunpack.c.l.b16 %v973
        %v1110 = vunpack.c.l.b16 %v974
        %v1111 = vunpack.c.l.b16 %v975
        %v1112 = vunpack.c.l.b16 %v976
        %v1113 = vunpack.c.l.b16 %v977
        %v1114 = vunpack.c.l.b16 %v978
        %v1115 = vunpack.c.l.b16 %v979
        %v1116 = vunpack.c.l.b16 %v980
        %v1117 = vunpack.c.l.b16 %v981
        %v1118 = vunpack.c.l.b16 %v982
        %v1119 = vunpack.c.l.b16 %v983
        %v1120 = vunpack.c.l.b16 %v984
        %v1121 = vpack.c.b16 %v1106, %v1105
        %v1122 = vpack.c.b16 %v1108, %v1107
        %v1123 = vpack.c.b16 %v1110, %v1109
        %v1124 = vpack.c.b16 %v1112, %v1111
        %v1125 = vpack.c.b16 %v1114, %v1113
        %v1126 = vpack.c.b16 %v1116, %v1115
        %v1127 = vpack.c.b16 %v1118, %v1117
        %v1128 = vpack.c.b16 %v1120, %v1119
        %v1137 = vunpack.c.l.b16 %v985
        %v1138 = vunpack.c.l.b16 %v986
        %v1139 = vunpack.c.l.b16 %v987
        %v1140 = vunpack.c.l.b16 %v988
        %v1141 = vunpack.c.l.b16 %v989
        %v1142 = vunpack.c.l.b16 %v990
        %v1143 = vunpack.c.l.b16 %v991
        %v1144 = vunpack.c.l.b16 %v992
        %v1145 = vpack.c.b16 %v1138, %v1137
        %v1146 = vpack.c.b16 %v1140, %v1139
        %v1147 = vpack.c.b16 %v1142, %v1141
        %v1148 = vpack.c.b16 %v1144, %v1143
        %vm1153 = vcmask 523264
        %v1155 = vsel %vm1153, %v1121, 0
        %v1158 = vsel %vm1153, %v1122, 0
        %v1161 = vsel %vm1153, %v1123, 0
        %v1164 = vsel %vm1153, %v1124, 0
        %v1167 = vsel %vm1153, %v1125, 0
        %v1170 = vsel %vm1153, %v1126, 0
        %v1173 = vsel %vm1153, %v1127, 0
        %v1176 = vsel %vm1153, %v1128, 0
        %1178 = vmatpush.bf16.msra.mxu0 0
        %1179 = vmatpush.bf16.msra.mxu0 0
        %1180 = vmatpush.bf16.msra.mxu0 0
        %1181 = vmatpush.bf16.msra.mxu0 0
        %1182 = vmatpush.bf16.msra.mxu0 %v1148
        %1183 = vmatpush.bf16.msra.mxu0 %v1147
        %1184 = vmatpush.bf16.msra.mxu0 %v1146
        %1185 = vmatpush.bf16.msra.mxu0 %v1145
        %1186 = vmatmul.bf16.gmra.mxu0 %v1155
        %v1187 = vpop.f32.mrf.mxu0
        %v1188 = vadd.f32 %v1012, %v1187
        %v1189 = vpop.f32.mrf.mxu0
        %v1190 = vadd.f32 %v1017, %v1189
        %1191 = vmatmul.bf16.gmra.mxu0 %v1158
        %v1192 = vpop.f32.mrf.mxu0
        %v1193 = vadd.f32 %v1022, %v1192
        %v1194 = vpop.f32.mrf.mxu0
        %v1195 = vadd.f32 %v1027, %v1194
        %1196 = vmatmul.bf16.gmra.mxu0 %v1161
        %v1197 = vpop.f32.mrf.mxu0
        %v1198 = vadd.f32 %v1032, %v1197
        %v1199 = vpop.f32.mrf.mxu0
        %v1200 = vadd.f32 %v1037, %v1199
        %1201 = vmatmul.bf16.gmra.mxu0 %v1164
        %v1202 = vpop.f32.mrf.mxu0
        %v1203 = vadd.f32 %v1042, %v1202
        %v1204 = vpop.f32.mrf.mxu0
        %v1205 = vadd.f32 %v1047, %v1204
        %1206 = vmatmul.bf16.gmra.mxu0 %v1167
        %v1207 = vpop.f32.mrf.mxu0
        %v1208 = vadd.f32 %v1052, %v1207
        %v1209 = vpop.f32.mrf.mxu0
        %v1210 = vadd.f32 %v1057, %v1209
        %1211 = vmatmul.bf16.gmra.mxu0 %v1170
        %v1212 = vpop.f32.mrf.mxu0
        %v1213 = vadd.f32 %v1062, %v1212
        %v1214 = vpop.f32.mrf.mxu0
        %v1215 = vadd.f32 %v1067, %v1214
        %1216 = vmatmul.bf16.gmra.mxu0 %v1173
        %v1217 = vpop.f32.mrf.mxu0
        %v1218 = vadd.f32 %v1072, %v1217
        %v1219 = vpop.f32.mrf.mxu0
        %v1220 = vadd.f32 %v1077, %v1219
        %1221 = vmatmul.bf16.gmra.mxu0 %v1176
        %v1222 = vpop.f32.mrf.mxu0
        %v1223 = vadd.f32 %v1082, %v1222
        %v1224 = vpop.f32.mrf.mxu0
        %v1225 = vadd.f32 %v1087, %v1224
        %1226 = vdwg.mxu0
        %v1227 = vmax.f32 %v1188, 0.0
        %v1228 = vmax.f32 %v1190, 0.0
        %v1229 = vmax.f32 %v1193, 0.0
        %v1230 = vmax.f32 %v1195, 0.0
        %v1231 = vmax.f32 %v1198, 0.0
        %v1232 = vmax.f32 %v1200, 0.0
        %v1233 = vmax.f32 %v1203, 0.0
        %v1234 = vmax.f32 %v1205, 0.0
        %v1235 = vmax.f32 %v1208, 0.0
        %v1236 = vmax.f32 %v1210, 0.0
        %v1237 = vmax.f32 %v1213, 0.0
        %v1238 = vmax.f32 %v1215, 0.0
        %v1239 = vmax.f32 %v1218, 0.0
        %v1240 = vmax.f32 %v1220, 0.0
        %v1241 = vmax.f32 %v1223, 0.0
        %v1242 = vmax.f32 %v1225, 0.0
        %v1243 = vpack.c.bf16 %v962, %v961
        %v1244 = vpack.c.bf16 %v964, %v963
        %v1245 = vpack.c.bf16 %v966, %v965
        %v1246 = vpack.c.bf16 %v968, %v967
        %v1247 = vpack.c.bf16 %v1228, %v1227
        %v1248 = vpack.c.bf16 %v1230, %v1229
        %v1249 = vpack.c.bf16 %v1232, %v1231
        %v1250 = vpack.c.bf16 %v1234, %v1233
        %v1251 = vpack.c.bf16 %v1236, %v1235
        %v1252 = vpack.c.bf16 %v1238, %v1237
        %v1253 = vpack.c.bf16 %v1240, %v1239
        %v1254 = vpack.c.bf16 %v1242, %v1241
        %v1255 = vld [vmem:[%s10] sm:$0xff]
        %v1256 = vld [vmem:[%s10 + $0x8] sm:$0xff]
        %v1257 = vld [vmem:[%s10 + $0x10] sm:$0xff]
        %v1258 = vld [vmem:[%s10 + $0x18] sm:$0xff]
        %v1263 = vunpack.c.l.b16 %v1255
        %v1264 = vunpack.c.h.b16 %v1255
        %v1265 = vunpack.c.l.b16 %v1256
        %v1266 = vunpack.c.h.b16 %v1256
        %v1267 = vunpack.c.l.b16 %v1257
        %v1268 = vunpack.c.h.b16 %v1257
        %v1269 = vunpack.c.l.b16 %v1258
        %v1270 = vunpack.c.h.b16 %v1258
        %v1271 = vpack.c.b16 %v1265, %v1263
        %v1272 = vpack.c.b16 %v1266, %v1264
        %v1273 = vpack.c.b16 %v1269, %v1267
        %v1274 = vpack.c.b16 %v1270, %v1268
        %v1278 = vsel %vm1153, %v1272, 0
        %v1281 = vsel %vm1153, %v1274, 0
        %1283 = vmatpush.bf16.msra.mxu0 %v1250
        %1284 = vmatpush.bf16.msra.mxu0 %v1249
        %1285 = vmatpush.bf16.msra.mxu0 %v1248
        %1286 = vmatpush.bf16.msra.mxu0 %v1247
        %1287 = vmatpush.bf16.msra.mxu0 %v1246
        %1288 = vmatpush.bf16.msra.mxu0 %v1245
        %1289 = vmatpush.bf16.msra.mxu0 %v1244
        %1290 = vmatpush.bf16.msra.mxu0 %v1243
        %1291 = vmatmul.bf16.gmra.mxu0 %v1271
        %v1292 = vpop.f32.mrf.mxu0
        %v1293 = vadd.f32 0.0, %v1292
        %v1294 = vpop.f32.mrf.mxu0
        %v1295 = vadd.f32 0.0, %v1294
        %1296 = vmatmul.bf16.gmra.mxu0 %v1273
        %v1297 = vpop.f32.mrf.mxu0
        %v1298 = vadd.f32 0.0, %v1297
        %v1299 = vpop.f32.mrf.mxu0
        %v1300 = vadd.f32 0.0, %v1299
        %1301 = vdwg.mxu0
        %1302 = vmatpush.bf16.msra.mxu0 0
        %1303 = vmatpush.bf16.msra.mxu0 0
        %1304 = vmatpush.bf16.msra.mxu0 0
        %1305 = vmatpush.bf16.msra.mxu0 0
        %1306 = vmatpush.bf16.msra.mxu0 %v1254
        %1307 = vmatpush.bf16.msra.mxu0 %v1253
        %1308 = vmatpush.bf16.msra.mxu0 %v1252
        %1309 = vmatpush.bf16.msra.mxu0 %v1251
        %1310 = vmatmul.bf16.gmra.mxu0 %v1278
        %v1311 = vpop.f32.mrf.mxu0
        %v1312 = vadd.f32 %v1293, %v1311
        %v1313 = vpop.f32.mrf.mxu0
        %v1314 = vadd.f32 %v1295, %v1313
        %1315 = vmatmul.bf16.gmra.mxu0 %v1281
        %v1316 = vpop.f32.mrf.mxu0
        %v1317 = vadd.f32 %v1298, %v1316
        %v1318 = vpop.f32.mrf.mxu0
        %v1319 = vadd.f32 %v1300, %v1318
        %1320 = vdwg.mxu0
        %1321 = vst [vmem:[%s575] sm:$0xff] %v1312
        %1322 = vst [vmem:[%s575 + $0x8] sm:$0xff] %v1314
        %1323 = vst [vmem:[%s575 + $0x10] sm:$0xff] %v1317
        %1324 = vst [vmem:[%s575 + $0x18] sm:$0xff] %v1319
        %s1325 = sand.u32 %s292, 1
        %s1326 = sand.u32 %s292, 1
        %s1327 = smul.addr %s1326, 32
        %s1328 = scalar_lea.vmem [#allocation5], %s1327
        // Predicated region
        $region151: #{spatial_pyramid_pooling.3} parent=137 // pred_check
          %p1329 = pneg %p302
        $region152: #{spatial_pyramid_pooling.3} parent=137 // pred_check_branch
          %1331 = sbr.rel (%p1329) target = $region154
        $region153: #{spatial_pyramid_pooling.3} parent=137 // pred_region
          %s1332 = smul.addr %s26, 8
          %s1333 = sadd.s32 %s27, %s1332
          %s1334 = smul.addr %s1333, 8
          %s1335 = scalar_lea.vmem %s11, %s1334
          // Predicated region
          $region155: #{spatial_pyramid_pooling.3} parent=153 // pred_check
            _
          $region156: #{spatial_pyramid_pooling.3} parent=153 // pred_check_branch
            %1337 = sbr.rel (0) target = $region158
          $region157: #{spatial_pyramid_pooling.3} parent=153 // pred_region
            // Predicated region
            $region159: #{spatial_pyramid_pooling.3} parent=157 // pred_check
              _
            $region160: #{spatial_pyramid_pooling.3} parent=157 // pred_check_branch
              %1339 = sbr.rel (0) target = $region162
            $region161: #{spatial_pyramid_pooling.3} parent=157 // pred_region
              // Predicated region
              $region174: #{spatial_pyramid_pooling.3} parent=161 // pred_check
                _
              $region175: #{spatial_pyramid_pooling.3} parent=161 // pred_check_branch
                %1361 = sbr.rel (0) target = $region177
              $region176: #{spatial_pyramid_pooling.3} parent=161 // pred_region
                loop: start=0, step=1, limit=1
                $region178: #{spatial_pyramid_pooling.3} parent=176 // loop_pre_header
                  _
                $region179: #{spatial_pyramid_pooling.3} parent=176 // loop_header
                  %s1363 = sphi 0, %s1367
                  %p1364 = scmp.ge.s32.totalorder %s1363, 1
                  %s1368 = sphi %s1328, %s1328
                  %s1369 = sphi %s1335, %s1335
                $region180: #{spatial_pyramid_pooling.3} parent=176 // loop_header_branch
                  %1366 = sbr.rel (%p1364) target = $region184
                $region181: #{spatial_pyramid_pooling.3} parent=176 // loop_body
                  %v1370 = vld [vmem:[%s1368] sm:$0xff]
                  %1371 = vst [vmem:[%s1369] sm:$0xff] %v1370
                  %v1372 = vld [vmem:[%s1368 + $0x8] sm:$0xff]
                  %1373 = vst [vmem:[%s1369 + $0x10] sm:$0xff] %v1372
                  %v1374 = vld [vmem:[%s1368 + $0x10] sm:$0xff]
                  %1375 = vst [vmem:[%s1369 + $0x20] sm:$0xff] %v1374
                  %v1376 = vld [vmem:[%s1368 + $0x18] sm:$0xff]
                  %1377 = vst [vmem:[%s1369 + $0x30] sm:$0xff] %v1376
                $region182: #{spatial_pyramid_pooling.3} parent=176 // loop_footer
                  %s1367 = sadd.s32 1, %s1363
                $region183: #{spatial_pyramid_pooling.3} parent=176 // loop_footer_branch
                  %1362 = sbr.rel target = $region179
                $region184: #{spatial_pyramid_pooling.3} parent=176 // loop_exit
                  _
              $region177: #{spatial_pyramid_pooling.3} parent=161 // pred_fallthru
                _
              // Predicated region
              $region185: #{spatial_pyramid_pooling.3} parent=161 // pred_check
                _
              $region186: #{spatial_pyramid_pooling.3} parent=161 // pred_check_branch
                %1379 = sbr.rel target = $region188
              $region187: #{spatial_pyramid_pooling.3} parent=161 // pred_region
                _
              $region188: #{spatial_pyramid_pooling.3} parent=161 // pred_fallthru
                _
            $region162: #{spatial_pyramid_pooling.3} parent=157 // pred_fallthru
              _
            // Predicated region
            $region163: #{spatial_pyramid_pooling.3} parent=157 // pred_check
              _
            $region164: #{spatial_pyramid_pooling.3} parent=157 // pred_check_branch
              %1341 = sbr.rel target = $region166
            $region165: #{spatial_pyramid_pooling.3} parent=157 // pred_region
              %s1343 = ssub.s32 256, 1
              loop: start=0, step=1, limit=1
              $region167: #{spatial_pyramid_pooling.3} parent=165 // loop_pre_header
                _
              $region168: #{spatial_pyramid_pooling.3} parent=165 // loop_header
                %s1345 = sphi 0, %s1349
                %p1346 = scmp.ge.s32.totalorder %s1345, 1
                %s1350 = sphi %s1328, %s1328
                %s1351 = sphi %s1335, %s1335
              $region169: #{spatial_pyramid_pooling.3} parent=165 // loop_header_branch
                %1348 = sbr.rel (%p1346) target = $region173
              $region170: #{spatial_pyramid_pooling.3} parent=165 // loop_body
                %v1352 = vld [vmem:[%s1350] sm:%s1343]
                %1353 = vst [vmem:[%s1351] sm:%s1343] %v1352
                %v1354 = vld [vmem:[%s1350 + $0x8] sm:%s1343]
                %1355 = vst [vmem:[%s1351 + $0x10] sm:%s1343] %v1354
                %v1356 = vld [vmem:[%s1350 + $0x10] sm:%s1343]
                %1357 = vst [vmem:[%s1351 + $0x20] sm:%s1343] %v1356
                %v1358 = vld [vmem:[%s1350 + $0x18] sm:%s1343]
                %1359 = vst [vmem:[%s1351 + $0x30] sm:%s1343] %v1358
              $region171: #{spatial_pyramid_pooling.3} parent=165 // loop_footer
                %s1349 = sadd.s32 1, %s1345
              $region172: #{spatial_pyramid_pooling.3} parent=165 // loop_footer_branch
                %1344 = sbr.rel target = $region168
              $region173: #{spatial_pyramid_pooling.3} parent=165 // loop_exit
                _
            $region166: #{spatial_pyramid_pooling.3} parent=157 // pred_fallthru
              _
          $region158: #{spatial_pyramid_pooling.3} parent=153 // pred_fallthru
            _
          %1380 = vnop
        $region154: #{spatial_pyramid_pooling.3} parent=137 // pred_fallthru
          _
      $region138: #{spatial_pyramid_pooling.3} parent=5 // pred_fallthru
        _
      %p1381 = scmp.le.s32.totalorder 2, %s17
      // Predicated region
      $region189: #{spatial_pyramid_pooling.3} parent=5 // pred_check
        %p1382 = pneg %p1381
      $region190: #{spatial_pyramid_pooling.3} parent=5 // pred_check_branch
        %1384 = sbr.rel (%p1382) target = $region192
      $region191: #{spatial_pyramid_pooling.3} parent=5 // pred_region
        %s1385 = ssub.s32 %s17, 2
        // Predicated region
        $region193: #{spatial_pyramid_pooling.3} parent=191 // pred_check
          %p1386 = pneg %p308
        $region194: #{spatial_pyramid_pooling.3} parent=191 // pred_check_branch
          %1388 = sbr.rel (%p1386) target = $region196
        $region195: #{spatial_pyramid_pooling.3} parent=191 // pred_region
          %s1389 = sand.u32 %s293, 1
          %s1390 = sand.u32 %s293, 1
          %s1391 = smul.addr %s1390, 32
          %s1392 = scalar_lea.vmem [#allocation5], %s1391
        $region196: #{spatial_pyramid_pooling.3} parent=191 // pred_fallthru
          _
      $region192: #{spatial_pyramid_pooling.3} parent=5 // pred_fallthru
        _
    $region6: #{spatial_pyramid_pooling.3} parent=1 // loop_footer
      %s21 = sadd.s32 1, %s17
    $region7: #{spatial_pyramid_pooling.3} parent=1 // loop_footer_branch
      %16 = sbr.rel target = $region3
    $region8: #{spatial_pyramid_pooling.3} parent=1 // loop_exit
      _

</llo_original>
